<compile_context>
chip_gen: v6e
topology: v6e:2x2x1
jax: 0.10.0
libtpu: 0.0.40
codegen_flags: <defaults>
</compile_context>

<pallas_src>
import functools

import jax
import jax.numpy as jnp
from jax.experimental import pallas as pl
from jax.experimental.pallas import tpu as pltpu

EPS = 1e-5


def basic_block_kernel(xflat_ref, resid_ref, vmask_ref, w1_ref, w2_ref, bn_ref,
                       out_ref, cols_ref, buf_ref, *, wp, n_px):
    # xflat_ref : (CP, LBUF)   zero-padded input, flat-anchor layout, bf16
    # resid_ref : (CP, LA)     lane-aligned residual slab (== x at the anchors), f32
    # vmask_ref : (1, LA)      1.0 at lanes that are real output pixels, else 0.0 (f32)
    # w1_ref    : (CP, 9*CP)   conv1 weights, columns ordered (kh, kw, cin_padded), bf16
    # w2_ref    : (CP, 9*CP)   conv2 weights, bf16
    # bn_ref    : (CP, 4)      BN affine params [g1, b1, g2, b2], f32
    # out_ref   : (CP, LA)     lane-dense output slab, f32
    # cols_ref  : (9*CP, LA)   VMEM im2col staging, bf16 (reused by both convs)
    # buf_ref   : (CP, LBUF)   VMEM re-padded conv1 activation, bf16
    CP = xflat_ref.shape[0]
    LA = out_ref.shape[1]
    margin = wp + 1
    inv_n = 1.0 / n_px
    vmask = vmask_ref[...]                                     # (1, LA) f32
    # Ones operand for MXU-based lane reductions (splat constant, no VMEM traffic).
    ones = jnp.ones((LA, 128), jnp.float32)

    def conv3x3(src_ref, w_ref):
        # Build the im2col LHS once: 9 lane-shifted, 8-sublane-aligned bf16 tile copies,
        # then a single bf16 MXU matmul with K = 9*CP, f32 accumulation.
        for dh in range(3):
            for dw in range(3):
                k = dh * wp + dw
                t = dh * 3 + dw
                cols_ref[t * CP:(t + 1) * CP, :] = src_ref[:, k:k + LA]
        return jnp.dot(w_ref[...], cols_ref[...],
                       preferred_element_type=jnp.float32)     # (CP, LA) f32

    def batchnorm(acc, g, b):
        # Training-mode BN over the valid pixels: biased batch stats, eps=1e-5, affine.
        # Lane reductions go through the (idle) MXU; variance is two-pass (centered).
        am = acc * vmask
        mean = jnp.dot(am, ones, preferred_element_type=jnp.float32)[:, 0:1] * inv_n
        cen = (acc - mean) * vmask
        var = jnp.dot(cen * cen, ones,
                      preferred_element_type=jnp.float32)[:, 0:1] * inv_n
        scale = jax.lax.rsqrt(var + EPS) * g
        return (acc - mean) * scale + b

    g1 = bn_ref[:, 0:1]
    b1 = bn_ref[:, 1:2]
    g2 = bn_ref[:, 2:3]
    b2 = bn_ref[:, 3:4]

    # ---- conv1 (3x3 / stride 1 / pad 1 / no bias) + bn1 + ReLU ----
    acc1 = conv3x3(xflat_ref, w1_ref)
    # Invalid-anchor lanes become 0 so they act as conv2's zero padding.
    y1 = jnp.maximum(batchnorm(acc1, g1, b1), 0.0) * vmask

    # ---- re-pad y1 for conv2: zero only the two margins, store the interior (bf16) ----
    buf_ref[:, 0:margin] = jnp.zeros((CP, margin), jnp.bfloat16)
    buf_ref[:, margin + LA:margin + LA + margin] = jnp.zeros((CP, margin), jnp.bfloat16)
    buf_ref[:, margin:margin + LA] = y1.astype(jnp.bfloat16)

    # ---- conv2 + bn2 ----
    acc2 = conv3x3(buf_ref, w2_ref)
    y2 = batchnorm(acc2, g2, b2)

    # ---- residual (stride=1, Cin==Cout, downsample=None) + ReLU ----
    out_ref[...] = jnp.maximum(y2 + resid_ref[...], 0.0)


@jax.jit
def basic_block_forward(x_nchw, w1_oihw, w2_oihw, g1, b1, g2, b2):
    """x_nchw: (N, C, H, W); w*_oihw: (Cout, Cin, 3, 3); g*/b*: (Cout,)."""
    N, C, H, W = x_nchw.shape
    Cout = w1_oihw.shape[0]
    assert Cout == C and w1_oihw.shape[1] == C, (
        "BasicBlock with stride=1 / downsample=None requires Cin == Cout")

    CP = ((max(C, 8) + 7) // 8) * 8        # sublane-aligned channel count
    Hp, Wp = H + 2, W + 2
    L = N * Hp * Wp                        # padded, flattened pixel count
    margin = Wp + 1
    la_min = L - 2 * margin                # anchors covering every valid output pixel
    LA = ((la_min + 127) // 128) * 128     # lane-dense anchor axis (multiple of 128)
    LBUF = LA + 2 * margin
    n_px = N * H * W

    # --- input: NCHW -> zero-pad H/W -> (CP, LBUF) flat-anchor layout ---
    xpad = jnp.pad(x_nchw.astype(jnp.float32), ((0, 0), (0, 0), (1, 1), (1, 1)))
    xflat_f32 = jnp.transpose(xpad, (1, 0, 2, 3)).reshape(C, L)
    xflat_f32 = jnp.pad(xflat_f32, ((0, CP - C), (0, LBUF - L)))
    xflat = xflat_f32.astype(jnp.bfloat16)             # conv source (MXU operand dtype)
    resid = xflat_f32[:, margin:margin + LA]           # lane-aligned residual slab, f32

    # --- {0,1} mask over anchor lanes marking real (non-padding) output pixels ---
    a = jnp.arange(LA)
    img = a // (Hp * Wp)
    hh = (a % (Hp * Wp)) // Wp
    ww = a % Wp
    vmask = ((img < N) & (hh < H) & (ww < W)).astype(jnp.float32).reshape(1, LA)

    # --- weights: OIHW -> (CP, 9*CP), columns ordered (kh, kw, cin_padded); bf16 ---
    def pack_w(w):
        w = jnp.pad(w, ((0, CP - Cout), (0, CP - C), (0, 0), (0, 0)))
        return jnp.transpose(w, (0, 2, 3, 1)).reshape(CP, 9 * CP).astype(jnp.bfloat16)

    w1k = pack_w(w1_oihw.astype(jnp.float32))
    w2k = pack_w(w2_oihw.astype(jnp.float32))

    # --- BN params folded into one (CP, 4) f32 input: [g1, b1, g2, b2] ---
    pad1 = jnp.ones((CP - Cout,), jnp.float32)
    pad0 = jnp.zeros((CP - Cout,), jnp.float32)
    bn_params = jnp.stack([
        jnp.concatenate([g1.astype(jnp.float32), pad1]),
        jnp.concatenate([b1.astype(jnp.float32), pad0]),
        jnp.concatenate([g2.astype(jnp.float32), pad1]),
        jnp.concatenate([b2.astype(jnp.float32), pad0]),
    ], axis=1)

    kernel = functools.partial(basic_block_kernel, wp=Wp, n_px=n_px)
    full2d = lambda s: pl.BlockSpec(s, lambda i: (0, 0))

    out_flat = pl.pallas_call(
        kernel,
        out_shape=jax.ShapeDtypeStruct((CP, LA), jnp.float32),
        grid=(1,),
        in_specs=[
            full2d((CP, LBUF)),         # xflat (bf16)
            full2d((CP, LA)),           # residual slab (f32)
            full2d((1, LA)),            # valid-pixel mask
            full2d((CP, 9 * CP)),       # conv1 weights
            full2d((CP, 9 * CP)),       # conv2 weights
            full2d((CP, 4)),            # folded BN params
        ],
        out_specs=full2d((CP, LA)),
        scratch_shapes=[
            pltpu.VMEM((9 * CP, LA), jnp.bfloat16),   # im2col staging (both convs)
            pltpu.VMEM((CP, LBUF), jnp.bfloat16),     # re-padded conv1 activation
        ],
        compiler_params=pltpu.CompilerParams(
            dimension_semantics=("arbitrary",),
            vmem_limit_bytes=32 * 1024 * 1024),
    )(xflat, resid, vmask, w1k, w2k, bn_params)

    # --- unpack: (CP, LA) anchor layout -> NCHW (pure layout plumbing, outside kernel) ---
    out_flat = out_flat[:Cout]
    if LA >= L:
        out_full = out_flat[:, :L]
    else:
        out_full = jnp.pad(out_flat, ((0, 0), (0, L - LA)))
    out = out_full.reshape(Cout, N, Hp, Wp)[:, :, :H, :W]
    return jnp.transpose(out, (1, 0, 2, 3))


def reference_forward(x, w1, w2, g1, b1, g2, b2):
    """Pure-JAX reference (NCHW), matching PyTorch training-mode forward."""
    def conv(h, w):
        return jax.lax.conv_general_dilated(
            h, w, window_strides=(1, 1), padding=((1, 1), (1, 1)),
            dimension_numbers=("NCHW", "OIHW", "NCHW"))

    def bn(h, g, b):
        mean = jnp.mean(h, axis=(0, 2, 3), keepdims=True)
        var = jnp.mean((h - mean) ** 2, axis=(0, 2, 3), keepdims=True)
        return ((h - mean) * jax.lax.rsqrt(var + EPS)
                * g.reshape(1, -1, 1, 1) + b.reshape(1, -1, 1, 1))

    out = jax.nn.relu(bn(conv(x, w1), g1, b1))
    out = bn(conv(out, w2), g2, b2)
    return jax.nn.relu(out + x)


if __name__ == "__main__":
    # Shapes consistent with BasicBlock(inplanes=4, planes=4, stride=1, downsample=None).
    N, C, H, W = 2, 4, 16, 16
    key = jax.random.PRNGKey(0)
    kx, kw1, kw2, kg1, kb1, kg2, kb2 = jax.random.split(key, 7)

    x = jax.random.normal(kx, (N, C, H, W), jnp.float32)
    w1 = 0.1 * jax.random.normal(kw1, (C, C, 3, 3), jnp.float32)   # OIHW
    w2 = 0.1 * jax.random.normal(kw2, (C, C, 3, 3), jnp.float32)   # OIHW
    g1 = 1.0 + 0.1 * jax.random.normal(kg1, (C,), jnp.float32)
    b1 = 0.1 * jax.random.normal(kb1, (C,), jnp.float32)
    g2 = 1.0 + 0.1 * jax.random.normal(kg2, (C,), jnp.float32)
    b2 = 0.1 * jax.random.normal(kb2, (C,), jnp.float32)

    out = basic_block_forward(x, w1, w2, g1, b1, g2, b2)
    out = jax.block_until_ready(out)

    ref = reference_forward(x, w1, w2, g1, b1, g2, b2)
    max_err = float(jnp.max(jnp.abs(out - ref)))
    assert out.shape == (N, C, H, W), out.shape
    # Tolerance loosened vs. pure-f32 because conv operands are bf16 on the MXU
    # (f32 accumulation); structural bugs would be O(0.1-1).
    assert max_err < 3e-2, f"mismatch vs reference: {max_err}"

    print("KERNEL_OK")
</pallas_src>

<mosaic_0001>
module attributes {stable_mosaic.version = 11 : i64} {
  func.func @basic_block_kernel(%arg0: i32, %arg1: memref<8x678xbf16, #tpu.memory_space<vmem>>, %arg2: memref<8x640xf32, #tpu.memory_space<vmem>>, %arg3: memref<1x640xf32, #tpu.memory_space<vmem>>, %arg4: memref<8x72xbf16, #tpu.memory_space<vmem>>, %arg5: memref<8x72xbf16, #tpu.memory_space<vmem>>, %arg6: memref<8x4xf32, #tpu.memory_space<vmem>>, %arg7: memref<8x640xf32, #tpu.memory_space<vmem>>, %arg8: memref<72x640xbf16, #tpu.memory_space<vmem>>, %arg9: memref<8x678xbf16, #tpu.memory_space<vmem>>) attributes {dimension_semantics = [#tpu.dimension_semantics<arbitrary>], iteration_bounds = array<i64: 1>, scalar_prefetch = 0 : i64, scratch_operands = 2 : i64, tpu.core_type = #tpu.core_type<tc>, window_params = [{pipeline_mode = #tpu.pipeline_mode<synchronous>, transform_indices = @transform_0, window_bounds = array<i64: 8, 678>}, {pipeline_mode = #tpu.pipeline_mode<synchronous>, transform_indices = @transform_1, window_bounds = array<i64: 8, 640>}, {pipeline_mode = #tpu.pipeline_mode<synchronous>, transform_indices = @transform_2, window_bounds = array<i64: 1, 640>}, {pipeline_mode = #tpu.pipeline_mode<synchronous>, transform_indices = @transform_3, window_bounds = array<i64: 8, 72>}, {pipeline_mode = #tpu.pipeline_mode<synchronous>, transform_indices = @transform_4, window_bounds = array<i64: 8, 72>}, {pipeline_mode = #tpu.pipeline_mode<synchronous>, transform_indices = @transform_5, window_bounds = array<i64: 8, 4>}, {pipeline_mode = #tpu.pipeline_mode<synchronous>, transform_indices = @transform_6, window_bounds = array<i64: 8, 640>}]} {
    %c0 = arith.constant 0 : index
    %c0_0 = arith.constant 0 : index
    %0 = vector.load %arg3[%c0, %c0_0] : memref<1x640xf32, #tpu.memory_space<vmem>>, vector<1x640xf32>
    %cst = arith.constant 1.000000e+00 : f32
    %1 = vector.broadcast %cst : f32 to vector<640x128xf32>
    %c0_1 = arith.constant 0 : index
    %c0_2 = arith.constant 0 : index
    %2 = vector.load %arg6[%c0_1, %c0_2] : memref<8x4xf32, #tpu.memory_space<vmem>>, vector<8x1xf32>
    %c0_3 = arith.constant 0 : index
    %c1 = arith.constant 1 : index
    %3 = vector.load %arg6[%c0_3, %c1] : memref<8x4xf32, #tpu.memory_space<vmem>>, vector<8x1xf32>
    %c0_4 = arith.constant 0 : index
    %c2 = arith.constant 2 : index
    %4 = vector.load %arg6[%c0_4, %c2] : memref<8x4xf32, #tpu.memory_space<vmem>>, vector<8x1xf32>
    %c0_5 = arith.constant 0 : index
    %c3 = arith.constant 3 : index
    %5 = vector.load %arg6[%c0_5, %c3] : memref<8x4xf32, #tpu.memory_space<vmem>>, vector<8x1xf32>
    %c0_6 = arith.constant 0 : index
    %c0_7 = arith.constant 0 : index
    %6 = vector.load %arg1[%c0_6, %c0_7] : memref<8x678xbf16, #tpu.memory_space<vmem>>, vector<8x640xbf16>
    %c0_8 = arith.constant 0 : index
    %c0_9 = arith.constant 0 : index
    %7 = vector.load %arg8[%c0_8, %c0_9] : memref<72x640xbf16, #tpu.memory_space<vmem>>, vector<8x640xbf16>
    tpu.vector_store %arg8[%c0_8, %c0_9], %6 {strides = array<i32>} : memref<72x640xbf16, #tpu.memory_space<vmem>>, vector<8x640xbf16>,
    %c0_10 = arith.constant 0 : index
    %c1_11 = arith.constant 1 : index
    %8 = vector.load %arg1[%c0_10, %c1_11] : memref<8x678xbf16, #tpu.memory_space<vmem>>, vector<8x640xbf16>
    %c8 = arith.constant 8 : index
    %c0_12 = arith.constant 0 : index
    %9 = vector.load %arg8[%c8, %c0_12] : memref<72x640xbf16, #tpu.memory_space<vmem>>, vector<8x640xbf16>
    tpu.vector_store %arg8[%c8, %c0_12], %8 {strides = array<i32>} : memref<72x640xbf16, #tpu.memory_space<vmem>>, vector<8x640xbf16>,
    %c0_13 = arith.constant 0 : index
    %c2_14 = arith.constant 2 : index
    %10 = vector.load %arg1[%c0_13, %c2_14] : memref<8x678xbf16, #tpu.memory_space<vmem>>, vector<8x640xbf16>
    %c16 = arith.constant 16 : index
    %c0_15 = arith.constant 0 : index
    %11 = vector.load %arg8[%c16, %c0_15] : memref<72x640xbf16, #tpu.memory_space<vmem>>, vector<8x640xbf16>
    tpu.vector_store %arg8[%c16, %c0_15], %10 {strides = array<i32>} : memref<72x640xbf16, #tpu.memory_space<vmem>>, vector<8x640xbf16>,
    %c0_16 = arith.constant 0 : index
    %c18 = arith.constant 18 : index
    %12 = vector.load %arg1[%c0_16, %c18] : memref<8x678xbf16, #tpu.memory_space<vmem>>, vector<8x640xbf16>
    %c24 = arith.constant 24 : index
    %c0_17 = arith.constant 0 : index
    %13 = vector.load %arg8[%c24, %c0_17] : memref<72x640xbf16, #tpu.memory_space<vmem>>, vector<8x640xbf16>
    tpu.vector_store %arg8[%c24, %c0_17], %12 {strides = array<i32>} : memref<72x640xbf16, #tpu.memory_space<vmem>>, vector<8x640xbf16>,
    %c0_18 = arith.constant 0 : index
    %c19 = arith.constant 19 : index
    %14 = vector.load %arg1[%c0_18, %c19] : memref<8x678xbf16, #tpu.memory_space<vmem>>, vector<8x640xbf16>
    %c32 = arith.constant 32 : index
    %c0_19 = arith.constant 0 : index
    %15 = vector.load %arg8[%c32, %c0_19] : memref<72x640xbf16, #tpu.memory_space<vmem>>, vector<8x640xbf16>
    tpu.vector_store %arg8[%c32, %c0_19], %14 {strides = array<i32>} : memref<72x640xbf16, #tpu.memory_space<vmem>>, vector<8x640xbf16>,
    %c0_20 = arith.constant 0 : index
    %c20 = arith.constant 20 : index
    %16 = vector.load %arg1[%c0_20, %c20] : memref<8x678xbf16, #tpu.memory_space<vmem>>, vector<8x640xbf16>
    %c40 = arith.constant 40 : index
    %c0_21 = arith.constant 0 : index
    %17 = vector.load %arg8[%c40, %c0_21] : memref<72x640xbf16, #tpu.memory_space<vmem>>, vector<8x640xbf16>
    tpu.vector_store %arg8[%c40, %c0_21], %16 {strides = array<i32>} : memref<72x640xbf16, #tpu.memory_space<vmem>>, vector<8x640xbf16>,
    %c0_22 = arith.constant 0 : index
    %c36 = arith.constant 36 : index
    %18 = vector.load %arg1[%c0_22, %c36] : memref<8x678xbf16, #tpu.memory_space<vmem>>, vector<8x640xbf16>
    %c48 = arith.constant 48 : index
    %c0_23 = arith.constant 0 : index
    %19 = vector.load %arg8[%c48, %c0_23] : memref<72x640xbf16, #tpu.memory_space<vmem>>, vector<8x640xbf16>
    tpu.vector_store %arg8[%c48, %c0_23], %18 {strides = array<i32>} : memref<72x640xbf16, #tpu.memory_space<vmem>>, vector<8x640xbf16>,
    %c0_24 = arith.constant 0 : index
    %c37 = arith.constant 37 : index
    %20 = vector.load %arg1[%c0_24, %c37] : memref<8x678xbf16, #tpu.memory_space<vmem>>, vector<8x640xbf16>
    %c56 = arith.constant 56 : index
    %c0_25 = arith.constant 0 : index
    %21 = vector.load %arg8[%c56, %c0_25] : memref<72x640xbf16, #tpu.memory_space<vmem>>, vector<8x640xbf16>
    tpu.vector_store %arg8[%c56, %c0_25], %20 {strides = array<i32>} : memref<72x640xbf16, #tpu.memory_space<vmem>>, vector<8x640xbf16>,
    %c0_26 = arith.constant 0 : index
    %c38 = arith.constant 38 : index
    %22 = vector.load %arg1[%c0_26, %c38] : memref<8x678xbf16, #tpu.memory_space<vmem>>, vector<8x640xbf16>
    %c64 = arith.constant 64 : index
    %c0_27 = arith.constant 0 : index
    %23 = vector.load %arg8[%c64, %c0_27] : memref<72x640xbf16, #tpu.memory_space<vmem>>, vector<8x640xbf16>
    tpu.vector_store %arg8[%c64, %c0_27], %22 {strides = array<i32>} : memref<72x640xbf16, #tpu.memory_space<vmem>>, vector<8x640xbf16>,
    %c0_28 = arith.constant 0 : index
    %c0_29 = arith.constant 0 : index
    %24 = vector.load %arg4[%c0_28, %c0_29] : memref<8x72xbf16, #tpu.memory_space<vmem>>, vector<8x72xbf16>
    %c0_30 = arith.constant 0 : index
    %c0_31 = arith.constant 0 : index
    %25 = vector.load %arg8[%c0_30, %c0_31] : memref<72x640xbf16, #tpu.memory_space<vmem>>, vector<72x640xbf16>
    %cst_32 = arith.constant dense<0.000000e+00> : vector<8x640xf32>
    %26 = tpu.matmul %24, %25, %cst_32 {dimension_numbers = #tpu.dot_dimension_numbers<[1], [0], [0], [1], [0, 0, 1, 1], [], []>} : vector<8x72xbf16>, vector<72x640xbf16>, vector<8x640xf32> -> vector<8x640xf32>
    %27 = vector.broadcast %0 : vector<1x640xf32> to vector<8x640xf32>
    %28 = arith.mulf %26, %27 : vector<8x640xf32>
    %cst_33 = arith.constant dense<0.000000e+00> : vector<8x128xf32>
    %29 = tpu.matmul %28, %1, %cst_33 {dimension_numbers = #tpu.dot_dimension_numbers<[1], [0], [0], [1], [0, 0, 1, 1], [], []>} : vector<8x640xf32>, vector<640x128xf32>, vector<8x128xf32> -> vector<8x128xf32>
    %30 = vector.extract_strided_slice %29 {offsets = [0, 0], sizes = [8, 1], strides = [1, 1]} : vector<8x128xf32> to vector<8x1xf32>
    %cst_34 = arith.constant 0.001953125 : f32
    %31 = vector.broadcast %cst_34 : f32 to vector<8x1xf32>
    %32 = arith.mulf %30, %31 : vector<8x1xf32>
    %33 = vector.broadcast %32 : vector<8x1xf32> to vector<8x640xf32>
    %34 = arith.subf %26, %33 : vector<8x640xf32>
    %35 = vector.broadcast %0 : vector<1x640xf32> to vector<8x640xf32>
    %36 = arith.mulf %34, %35 : vector<8x640xf32>
    %37 = arith.mulf %36, %36 : vector<8x640xf32>
    %cst_35 = arith.constant dense<0.000000e+00> : vector<8x128xf32>
    %38 = tpu.matmul %37, %1, %cst_35 {dimension_numbers = #tpu.dot_dimension_numbers<[1], [0], [0], [1], [0, 0, 1, 1], [], []>} : vector<8x640xf32>, vector<640x128xf32>, vector<8x128xf32> -> vector<8x128xf32>
    %39 = vector.extract_strided_slice %38 {offsets = [0, 0], sizes = [8, 1], strides = [1, 1]} : vector<8x128xf32> to vector<8x1xf32>
    %cst_36 = arith.constant 0.001953125 : f32
    %40 = vector.broadcast %cst_36 : f32 to vector<8x1xf32>
    %41 = arith.mulf %39, %40 : vector<8x1xf32>
    %cst_37 = arith.constant 9.99999974E-6 : f32
    %42 = vector.broadcast %cst_37 : f32 to vector<8x1xf32>
    %43 = arith.addf %41, %42 : vector<8x1xf32>
    %44 = math.rsqrt %43 : vector<8x1xf32>
    %45 = arith.mulf %44, %2 : vector<8x1xf32>
    %46 = vector.broadcast %32 : vector<8x1xf32> to vector<8x640xf32>
    %47 = arith.subf %26, %46 : vector<8x640xf32>
    %48 = vector.broadcast %45 : vector<8x1xf32> to vector<8x640xf32>
    %49 = arith.mulf %47, %48 : vector<8x640xf32>
    %50 = vector.broadcast %3 : vector<8x1xf32> to vector<8x640xf32>
    %51 = arith.addf %49, %50 : vector<8x640xf32>
    %cst_38 = arith.constant 0.000000e+00 : f32
    %52 = vector.broadcast %cst_38 : f32 to vector<8x640xf32>
    %53 = arith.maximumf %51, %52 : vector<8x640xf32>
    %54 = vector.broadcast %0 : vector<1x640xf32> to vector<8x640xf32>
    %55 = arith.mulf %53, %54 : vector<8x640xf32>
    %cst_39 = arith.constant 0.000000e+00 : bf16
    %56 = vector.broadcast %cst_39 : bf16 to vector<8x19xbf16>
    %c0_40 = arith.constant 0 : index
    %c0_41 = arith.constant 0 : index
    %57 = vector.load %arg9[%c0_40, %c0_41] : memref<8x678xbf16, #tpu.memory_space<vmem>>, vector<8x19xbf16>
    tpu.vector_store %arg9[%c0_40, %c0_41], %56 {strides = array<i32>} : memref<8x678xbf16, #tpu.memory_space<vmem>>, vector<8x19xbf16>,
    %cst_42 = arith.constant 0.000000e+00 : bf16
    %58 = vector.broadcast %cst_42 : bf16 to vector<8x19xbf16>
    %c0_43 = arith.constant 0 : index
    %c659 = arith.constant 659 : index
    %59 = vector.load %arg9[%c0_43, %c659] : memref<8x678xbf16, #tpu.memory_space<vmem>>, vector<8x19xbf16>
    tpu.vector_store %arg9[%c0_43, %c659], %58 {strides = array<i32>} : memref<8x678xbf16, #tpu.memory_space<vmem>>, vector<8x19xbf16>,
    %60 = arith.truncf %55 : vector<8x640xf32> to vector<8x640xbf16>
    %c0_44 = arith.constant 0 : index
    %c19_45 = arith.constant 19 : index
    %61 = vector.load %arg9[%c0_44, %c19_45] : memref<8x678xbf16, #tpu.memory_space<vmem>>, vector<8x640xbf16>
    tpu.vector_store %arg9[%c0_44, %c19_45], %60 {strides = array<i32>} : memref<8x678xbf16, #tpu.memory_space<vmem>>, vector<8x640xbf16>,
    %c0_46 = arith.constant 0 : index
    %c0_47 = arith.constant 0 : index
    %62 = vector.load %arg9[%c0_46, %c0_47] : memref<8x678xbf16, #tpu.memory_space<vmem>>, vector<8x640xbf16>
    %c0_48 = arith.constant 0 : index
    %c0_49 = arith.constant 0 : index
    %63 = vector.load %arg8[%c0_48, %c0_49] : memref<72x640xbf16, #tpu.memory_space<vmem>>, vector<8x640xbf16>
    tpu.vector_store %arg8[%c0_48, %c0_49], %62 {strides = array<i32>} : memref<72x640xbf16, #tpu.memory_space<vmem>>, vector<8x640xbf16>,
    %c0_50 = arith.constant 0 : index
    %c1_51 = arith.constant 1 : index
    %64 = vector.load %arg9[%c0_50, %c1_51] : memref<8x678xbf16, #tpu.memory_space<vmem>>, vector<8x640xbf16>
    %c8_52 = arith.constant 8 : index
    %c0_53 = arith.constant 0 : index
    %65 = vector.load %arg8[%c8_52, %c0_53] : memref<72x640xbf16, #tpu.memory_space<vmem>>, vector<8x640xbf16>
    tpu.vector_store %arg8[%c8_52, %c0_53], %64 {strides = array<i32>} : memref<72x640xbf16, #tpu.memory_space<vmem>>, vector<8x640xbf16>,
    %c0_54 = arith.constant 0 : index
    %c2_55 = arith.constant 2 : index
    %66 = vector.load %arg9[%c0_54, %c2_55] : memref<8x678xbf16, #tpu.memory_space<vmem>>, vector<8x640xbf16>
    %c16_56 = arith.constant 16 : index
    %c0_57 = arith.constant 0 : index
    %67 = vector.load %arg8[%c16_56, %c0_57] : memref<72x640xbf16, #tpu.memory_space<vmem>>, vector<8x640xbf16>
    tpu.vector_store %arg8[%c16_56, %c0_57], %66 {strides = array<i32>} : memref<72x640xbf16, #tpu.memory_space<vmem>>, vector<8x640xbf16>,
    %c0_58 = arith.constant 0 : index
    %c18_59 = arith.constant 18 : index
    %68 = vector.load %arg9[%c0_58, %c18_59] : memref<8x678xbf16, #tpu.memory_space<vmem>>, vector<8x640xbf16>
    %c24_60 = arith.constant 24 : index
    %c0_61 = arith.constant 0 : index
    %69 = vector.load %arg8[%c24_60, %c0_61] : memref<72x640xbf16, #tpu.memory_space<vmem>>, vector<8x640xbf16>
    tpu.vector_store %arg8[%c24_60, %c0_61], %68 {strides = array<i32>} : memref<72x640xbf16, #tpu.memory_space<vmem>>, vector<8x640xbf16>,
    %c0_62 = arith.constant 0 : index
    %c19_63 = arith.constant 19 : index
    %70 = vector.load %arg9[%c0_62, %c19_63] : memref<8x678xbf16, #tpu.memory_space<vmem>>, vector<8x640xbf16>
    %c32_64 = arith.constant 32 : index
    %c0_65 = arith.constant 0 : index
    %71 = vector.load %arg8[%c32_64, %c0_65] : memref<72x640xbf16, #tpu.memory_space<vmem>>, vector<8x640xbf16>
    tpu.vector_store %arg8[%c32_64, %c0_65], %70 {strides = array<i32>} : memref<72x640xbf16, #tpu.memory_space<vmem>>, vector<8x640xbf16>,
    %c0_66 = arith.constant 0 : index
    %c20_67 = arith.constant 20 : index
    %72 = vector.load %arg9[%c0_66, %c20_67] : memref<8x678xbf16, #tpu.memory_space<vmem>>, vector<8x640xbf16>
    %c40_68 = arith.constant 40 : index
    %c0_69 = arith.constant 0 : index
    %73 = vector.load %arg8[%c40_68, %c0_69] : memref<72x640xbf16, #tpu.memory_space<vmem>>, vector<8x640xbf16>
    tpu.vector_store %arg8[%c40_68, %c0_69], %72 {strides = array<i32>} : memref<72x640xbf16, #tpu.memory_space<vmem>>, vector<8x640xbf16>,
    %c0_70 = arith.constant 0 : index
    %c36_71 = arith.constant 36 : index
    %74 = vector.load %arg9[%c0_70, %c36_71] : memref<8x678xbf16, #tpu.memory_space<vmem>>, vector<8x640xbf16>
    %c48_72 = arith.constant 48 : index
    %c0_73 = arith.constant 0 : index
    %75 = vector.load %arg8[%c48_72, %c0_73] : memref<72x640xbf16, #tpu.memory_space<vmem>>, vector<8x640xbf16>
    tpu.vector_store %arg8[%c48_72, %c0_73], %74 {strides = array<i32>} : memref<72x640xbf16, #tpu.memory_space<vmem>>, vector<8x640xbf16>,
    %c0_74 = arith.constant 0 : index
    %c37_75 = arith.constant 37 : index
    %76 = vector.load %arg9[%c0_74, %c37_75] : memref<8x678xbf16, #tpu.memory_space<vmem>>, vector<8x640xbf16>
    %c56_76 = arith.constant 56 : index
    %c0_77 = arith.constant 0 : index
    %77 = vector.load %arg8[%c56_76, %c0_77] : memref<72x640xbf16, #tpu.memory_space<vmem>>, vector<8x640xbf16>
    tpu.vector_store %arg8[%c56_76, %c0_77], %76 {strides = array<i32>} : memref<72x640xbf16, #tpu.memory_space<vmem>>, vector<8x640xbf16>,
    %c0_78 = arith.constant 0 : index
    %c38_79 = arith.constant 38 : index
    %78 = vector.load %arg9[%c0_78, %c38_79] : memref<8x678xbf16, #tpu.memory_space<vmem>>, vector<8x640xbf16>
    %c64_80 = arith.constant 64 : index
    %c0_81 = arith.constant 0 : index
    %79 = vector.load %arg8[%c64_80, %c0_81] : memref<72x640xbf16, #tpu.memory_space<vmem>>, vector<8x640xbf16>
    tpu.vector_store %arg8[%c64_80, %c0_81], %78 {strides = array<i32>} : memref<72x640xbf16, #tpu.memory_space<vmem>>, vector<8x640xbf16>,
    %c0_82 = arith.constant 0 : index
    %c0_83 = arith.constant 0 : index
    %80 = vector.load %arg5[%c0_82, %c0_83] : memref<8x72xbf16, #tpu.memory_space<vmem>>, vector<8x72xbf16>
    %c0_84 = arith.constant 0 : index
    %c0_85 = arith.constant 0 : index
    %81 = vector.load %arg8[%c0_84, %c0_85] : memref<72x640xbf16, #tpu.memory_space<vmem>>, vector<72x640xbf16>
    %cst_86 = arith.constant dense<0.000000e+00> : vector<8x640xf32>
    %82 = tpu.matmul %80, %81, %cst_86 {dimension_numbers = #tpu.dot_dimension_numbers<[1], [0], [0], [1], [0, 0, 1, 1], [], []>} : vector<8x72xbf16>, vector<72x640xbf16>, vector<8x640xf32> -> vector<8x640xf32>
    %83 = vector.broadcast %0 : vector<1x640xf32> to vector<8x640xf32>
    %84 = arith.mulf %82, %83 : vector<8x640xf32>
    %cst_87 = arith.constant dense<0.000000e+00> : vector<8x128xf32>
    %85 = tpu.matmul %84, %1, %cst_87 {dimension_numbers = #tpu.dot_dimension_numbers<[1], [0], [0], [1], [0, 0, 1, 1], [], []>} : vector<8x640xf32>, vector<640x128xf32>, vector<8x128xf32> -> vector<8x128xf32>
    %86 = vector.extract_strided_slice %85 {offsets = [0, 0], sizes = [8, 1], strides = [1, 1]} : vector<8x128xf32> to vector<8x1xf32>
    %cst_88 = arith.constant 0.001953125 : f32
    %87 = vector.broadcast %cst_88 : f32 to vector<8x1xf32>
    %88 = arith.mulf %86, %87 : vector<8x1xf32>
    %89 = vector.broadcast %88 : vector<8x1xf32> to vector<8x640xf32>
    %90 = arith.subf %82, %89 : vector<8x640xf32>
    %91 = vector.broadcast %0 : vector<1x640xf32> to vector<8x640xf32>
    %92 = arith.mulf %90, %91 : vector<8x640xf32>
    %93 = arith.mulf %92, %92 : vector<8x640xf32>
    %cst_89 = arith.constant dense<0.000000e+00> : vector<8x128xf32>
    %94 = tpu.matmul %93, %1, %cst_89 {dimension_numbers = #tpu.dot_dimension_numbers<[1], [0], [0], [1], [0, 0, 1, 1], [], []>} : vector<8x640xf32>, vector<640x128xf32>, vector<8x128xf32> -> vector<8x128xf32>
    %95 = vector.extract_strided_slice %94 {offsets = [0, 0], sizes = [8, 1], strides = [1, 1]} : vector<8x128xf32> to vector<8x1xf32>
    %cst_90 = arith.constant 0.001953125 : f32
    %96 = vector.broadcast %cst_90 : f32 to vector<8x1xf32>
    %97 = arith.mulf %95, %96 : vector<8x1xf32>
    %cst_91 = arith.constant 9.99999974E-6 : f32
    %98 = vector.broadcast %cst_91 : f32 to vector<8x1xf32>
    %99 = arith.addf %97, %98 : vector<8x1xf32>
    %100 = math.rsqrt %99 : vector<8x1xf32>
    %101 = arith.mulf %100, %4 : vector<8x1xf32>
    %102 = vector.broadcast %88 : vector<8x1xf32> to vector<8x640xf32>
    %103 = arith.subf %82, %102 : vector<8x640xf32>
    %104 = vector.broadcast %101 : vector<8x1xf32> to vector<8x640xf32>
    %105 = arith.mulf %103, %104 : vector<8x640xf32>
    %106 = vector.broadcast %5 : vector<8x1xf32> to vector<8x640xf32>
    %107 = arith.addf %105, %106 : vector<8x640xf32>
    %c0_92 = arith.constant 0 : index
    %c0_93 = arith.constant 0 : index
    %108 = vector.load %arg2[%c0_92, %c0_93] : memref<8x640xf32, #tpu.memory_space<vmem>>, vector<8x640xf32>
    %109 = arith.addf %107, %108 : vector<8x640xf32>
    %cst_94 = arith.constant 0.000000e+00 : f32
    %110 = vector.broadcast %cst_94 : f32 to vector<8x640xf32>
    %111 = arith.maximumf %109, %110 : vector<8x640xf32>
    %c0_95 = arith.constant 0 : index
    %c0_96 = arith.constant 0 : index
    %112 = vector.load %arg7[%c0_95, %c0_96] : memref<8x640xf32, #tpu.memory_space<vmem>>, vector<8x640xf32>
    tpu.vector_store %arg7[%c0_95, %c0_96], %111 {strides = array<i32>} : memref<8x640xf32, #tpu.memory_space<vmem>>, vector<8x640xf32>,
    return
  }
  func.func @transform_0(%arg0: i32) -> (i32, i32) {
    %c0_i32 = arith.constant 0 : i32
    %c0_i32_0 = arith.constant 0 : i32
    %c0_i32_1 = arith.constant 0 : i32
    return %c0_i32, %c0_i32_0 : i32, i32
  }
  func.func @transform_1(%arg0: i32) -> (i32, i32) {
    %c0_i32 = arith.constant 0 : i32
    %c0_i32_0 = arith.constant 0 : i32
    %c0_i32_1 = arith.constant 0 : i32
    return %c0_i32, %c0_i32_0 : i32, i32
  }
  func.func @transform_2(%arg0: i32) -> (i32, i32) {
    %c0_i32 = arith.constant 0 : i32
    %c0_i32_0 = arith.constant 0 : i32
    %c0_i32_1 = arith.constant 0 : i32
    return %c0_i32, %c0_i32_0 : i32, i32
  }
  func.func @transform_3(%arg0: i32) -> (i32, i32) {
    %c0_i32 = arith.constant 0 : i32
    %c0_i32_0 = arith.constant 0 : i32
    %c0_i32_1 = arith.constant 0 : i32
    return %c0_i32, %c0_i32_0 : i32, i32
  }
  func.func @transform_4(%arg0: i32) -> (i32, i32) {
    %c0_i32 = arith.constant 0 : i32
    %c0_i32_0 = arith.constant 0 : i32
    %c0_i32_1 = arith.constant 0 : i32
    return %c0_i32, %c0_i32_0 : i32, i32
  }
  func.func @transform_5(%arg0: i32) -> (i32, i32) {
    %c0_i32 = arith.constant 0 : i32
    %c0_i32_0 = arith.constant 0 : i32
    %c0_i32_1 = arith.constant 0 : i32
    return %c0_i32, %c0_i32_0 : i32, i32
  }
  func.func @transform_6(%arg0: i32) -> (i32, i32) {
    %c0_i32 = arith.constant 0 : i32
    %c0_i32_0 = arith.constant 0 : i32
    %c0_i32_1 = arith.constant 0 : i32
    return %c0_i32, %c0_i32_0 : i32, i32
  }
}

</mosaic_0001>

<llo_original>
// kernel: basic_block_forward.1
$region0: #{basic_block_forward.1}
  #allocation0 [shape = 'u32[]', space=smem, size = 0x4, offset = 0x4, fixed_abs, tag = 'smem constant byte address 0x4 - core index']
  #allocation1 [shape = 'u32[144,128]{1,0:T(1,128)}', space=vmem, size = 0x12000, scoped, tag = 'internal scratch']
  #allocation2 [shape = 'bf16[72,640]{1,0:T(8,128)(2,1)}', space=vmem, size = 0x16800, scoped, tag = 'scratch operand']
  #allocation3 [shape = 'bf16[8,678]{1,0:T(8,128)(2,1)}', space=vmem, size = 0x3000, scoped, tag = 'scratch operand']
  %s0 = inlined_call_operand.vmem [shape: bf16[8,678], index: 0, kind: input, shape index: {}]
  %s1 = inlined_call_operand.vmem [shape: f32[8,640], index: 1, kind: input, shape index: {}]
  %s2 = inlined_call_operand.vmem [shape: f32[1,640], index: 2, kind: input, shape index: {}]
  %s3 = inlined_call_operand.vmem [shape: bf16[8,72], index: 3, kind: input, shape index: {}]
  %s4 = inlined_call_operand.vmem [shape: bf16[8,72], index: 4, kind: input, shape index: {}]
  %s5 = inlined_call_operand.vmem [shape: f32[8,4], index: 5, kind: input, shape index: {}]
  %s6 = inlined_call_operand.vmem [shape: f32[8,640], index: 6, kind: output, shape index: {}]
  %s7 = sld [smem:[#allocation0]]
  $region34: #{basic_block_forward.1} parent=0
    _
  %s9 = ssub.s32 1, %s7
  %s10 = scalar_select 0, %s9, %s7
  // Predicated region
  $region2: #{basic_block_forward.1} parent=0 // pred_check
    _
  $region3: #{basic_block_forward.1} parent=0 // pred_check_branch
    %12 = sbr.rel (0) target = $region5
  $region4: #{basic_block_forward.1} parent=0 // pred_region
    _
  $region5: #{basic_block_forward.1} parent=0 // pred_fallthru
    _
  // Predicated region
  $region6: #{basic_block_forward.1} parent=0 // pred_check
    _
  $region7: #{basic_block_forward.1} parent=0 // pred_check_branch
    %14 = sbr.rel (0) target = $region9
  $region8: #{basic_block_forward.1} parent=0 // pred_region
    _
  $region9: #{basic_block_forward.1} parent=0 // pred_fallthru
    _
  // Predicated region
  $region10: #{basic_block_forward.1} parent=0 // pred_check
    _
  $region11: #{basic_block_forward.1} parent=0 // pred_check_branch
    %16 = sbr.rel (0) target = $region13
  $region12: #{basic_block_forward.1} parent=0 // pred_region
    _
  $region13: #{basic_block_forward.1} parent=0 // pred_fallthru
    _
  // Predicated region
  $region14: #{basic_block_forward.1} parent=0 // pred_check
    _
  $region15: #{basic_block_forward.1} parent=0 // pred_check_branch
    %18 = sbr.rel (0) target = $region17
  $region16: #{basic_block_forward.1} parent=0 // pred_region
    _
  $region17: #{basic_block_forward.1} parent=0 // pred_fallthru
    _
  // Predicated region
  $region18: #{basic_block_forward.1} parent=0 // pred_check
    _
  $region19: #{basic_block_forward.1} parent=0 // pred_check_branch
    %20 = sbr.rel (0) target = $region21
  $region20: #{basic_block_forward.1} parent=0 // pred_region
    _
  $region21: #{basic_block_forward.1} parent=0 // pred_fallthru
    _
  // Predicated region
  $region22: #{basic_block_forward.1} parent=0 // pred_check
    _
  $region23: #{basic_block_forward.1} parent=0 // pred_check_branch
    %22 = sbr.rel (0) target = $region25
  $region24: #{basic_block_forward.1} parent=0 // pred_region
    _
  $region25: #{basic_block_forward.1} parent=0 // pred_fallthru
    _
  %v24 = vld [vmem:[%s2] sm:$0x1f]
  %v25 = vld [vmem:[%s5] sm:$0xff]
  %v26 = vld [vmem:[%s0] sm:$0xff]
  %v27 = vld [vmem:[%s0 + $0x8] sm:$0xff]
  %v28 = vld [vmem:[%s0 + $0x10] sm:$0xf]
  %29 = vst [vmem:[#allocation2] sm:$0xff] %v26
  %30 = vst [vmem:[#allocation2 + $0x8] sm:$0xff] %v27
  %31 = vst [vmem:[#allocation2 + $0x10] sm:$0xf] %v28
  %v32 = vld [vmem:[%s0] sm:$0xff]
  %v33 = vld [vmem:[%s0 + $0x8] sm:$0xff]
  %v34 = vld [vmem:[%s0 + $0x10] sm:$0xff]
  %38 = vrot.lane.b32.xlu0 %v32, 127
  %v39 = vpop.permute.xlu0 %38
  %40 = vrot.lane.b32.xlu0 %v33, 127
  %v41 = vpop.permute.xlu0 %40
  %42 = vrot.lane.b32.xlu0 %v34, 127
  %v43 = vpop.permute.xlu0 %42
  %v44 = vrot.slane %v39, 4
  %v45 = vrot.slane %v41, 4
  %v46 = vrot.slane %v43, 4
  %vm47 = vcmask 1043456
  %v48 = vsel %vm47, %v44, %v45
  %vm49 = vcmask 1039360
  %v50 = vsel %vm49, %v39, %v48
  %v51 = vsel %vm47, %v45, %v46
  %v52 = vsel %vm49, %v41, %v51
  %v53 = vsel %vm49, %v43, %v46
  %57 = vst [vmem:[#allocation2 + $0x14] sm:$0xff] %v50
  %58 = vst [vmem:[#allocation2 + $0x1c] sm:$0xff] %v52
  %59 = vst [vmem:[#allocation2 + $0x24] sm:$0xf] %v53
  %v60 = vld [vmem:[%s0] sm:$0xff]
  %v61 = vld [vmem:[%s0 + $0x8] sm:$0xff]
  %v62 = vld [vmem:[%s0 + $0x10] sm:$0xff]
  %66 = vrot.lane.b32.xlu0 %v60, 126
  %v67 = vpop.permute.xlu0 %66
  %68 = vrot.lane.b32.xlu0 %v61, 126
  %v69 = vpop.permute.xlu0 %68
  %70 = vrot.lane.b32.xlu0 %v62, 126
  %v71 = vpop.permute.xlu0 %70
  %v72 = vrot.slane %v67, 4
  %v73 = vrot.slane %v69, 4
  %v74 = vrot.slane %v71, 4
  %v75 = vsel %vm47, %v72, %v73
  %vm76 = vcmask 1031168
  %v77 = vsel %vm76, %v67, %v75
  %v78 = vsel %vm47, %v73, %v74
  %v79 = vsel %vm76, %v69, %v78
  %v80 = vsel %vm76, %v71, %v74
  %84 = vst [vmem:[#allocation2 + $0x28] sm:$0xff] %v77
  %85 = vst [vmem:[#allocation2 + $0x30] sm:$0xff] %v79
  %86 = vst [vmem:[#allocation2 + $0x38] sm:$0xf] %v80
  %v87 = vld [vmem:[%s0] sm:$0xff]
  %v88 = vld [vmem:[%s0 + $0x8] sm:$0xff]
  %v89 = vld [vmem:[%s0 + $0x10] sm:$0xff]
  %93 = vrot.lane.b32.xlu0 %v87, 110
  %v94 = vpop.permute.xlu0 %93
  %95 = vrot.lane.b32.xlu0 %v88, 110
  %v96 = vpop.permute.xlu0 %95
  %97 = vrot.lane.b32.xlu0 %v89, 110
  %v98 = vpop.permute.xlu0 %97
  %v99 = vrot.slane %v94, 4
  %v100 = vrot.slane %v96, 4
  %v101 = vrot.slane %v98, 4
  %v102 = vsel %vm47, %v99, %v100
  %vm103 = vcmask 900096
  %v104 = vsel %vm103, %v94, %v102
  %v105 = vsel %vm47, %v100, %v101
  %v106 = vsel %vm103, %v96, %v105
  %v107 = vsel %vm103, %v98, %v101
  %111 = vst [vmem:[#allocation2 + $0x3c] sm:$0xff] %v104
  %112 = vst [vmem:[#allocation2 + $0x44] sm:$0xff] %v106
  %113 = vst [vmem:[#allocation2 + $0x4c] sm:$0xf] %v107
  %v114 = vld [vmem:[%s0] sm:$0xff]
  %v115 = vld [vmem:[%s0 + $0x8] sm:$0xff]
  %v116 = vld [vmem:[%s0 + $0x10] sm:$0xff]
  %120 = vrot.lane.b32.xlu0 %v114, 109
  %v121 = vpop.permute.xlu0 %120
  %122 = vrot.lane.b32.xlu0 %v115, 109
  %v123 = vpop.permute.xlu0 %122
  %124 = vrot.lane.b32.xlu0 %v116, 109
  %v125 = vpop.permute.xlu0 %124
  %v126 = vrot.slane %v121, 4
  %v127 = vrot.slane %v123, 4
  %v128 = vrot.slane %v125, 4
  %v129 = vsel %vm47, %v126, %v127
  %vm130 = vcmask 891904
  %v131 = vsel %vm130, %v121, %v129
  %v132 = vsel %vm47, %v127, %v128
  %v133 = vsel %vm130, %v123, %v132
  %v134 = vsel %vm130, %v125, %v128
  %138 = vst [vmem:[#allocation2 + $0x50] sm:$0xff] %v131
  %139 = vst [vmem:[#allocation2 + $0x58] sm:$0xff] %v133
  %140 = vst [vmem:[#allocation2 + $0x60] sm:$0xf] %v134
  %v141 = vld [vmem:[%s0] sm:$0xff]
  %v142 = vld [vmem:[%s0 + $0x8] sm:$0xff]
  %v143 = vld [vmem:[%s0 + $0x10] sm:$0xff]
  %147 = vrot.lane.b32.xlu0 %v141, 108
  %v148 = vpop.permute.xlu0 %147
  %149 = vrot.lane.b32.xlu0 %v142, 108
  %v150 = vpop.permute.xlu0 %149
  %151 = vrot.lane.b32.xlu0 %v143, 108
  %v152 = vpop.permute.xlu0 %151
  %v153 = vrot.slane %v148, 4
  %v154 = vrot.slane %v150, 4
  %v155 = vrot.slane %v152, 4
  %v156 = vsel %vm47, %v153, %v154
  %vm157 = vcmask 883712
  %v158 = vsel %vm157, %v148, %v156
  %v159 = vsel %vm47, %v154, %v155
  %v160 = vsel %vm157, %v150, %v159
  %v161 = vsel %vm157, %v152, %v155
  %165 = vst [vmem:[#allocation2 + $0x64] sm:$0xff] %v158
  %166 = vst [vmem:[#allocation2 + $0x6c] sm:$0xff] %v160
  %167 = vst [vmem:[#allocation2 + $0x74] sm:$0xf] %v161
  %v168 = vld [vmem:[%s0] sm:$0xff]
  %v169 = vld [vmem:[%s0 + $0x8] sm:$0xff]
  %v170 = vld [vmem:[%s0 + $0x10] sm:$0xff]
  %174 = vrot.lane.b32.xlu0 %v168, 92
  %v175 = vpop.permute.xlu0 %174
  %176 = vrot.lane.b32.xlu0 %v169, 92
  %v177 = vpop.permute.xlu0 %176
  %178 = vrot.lane.b32.xlu0 %v170, 92
  %v179 = vpop.permute.xlu0 %178
  %v180 = vrot.slane %v175, 4
  %v181 = vrot.slane %v177, 4
  %v182 = vrot.slane %v179, 4
  %v183 = vsel %vm47, %v180, %v181
  %vm184 = vcmask 752640
  %v185 = vsel %vm184, %v175, %v183
  %v186 = vsel %vm47, %v181, %v182
  %v187 = vsel %vm184, %v177, %v186
  %v188 = vsel %vm184, %v179, %v182
  %192 = vst [vmem:[#allocation2 + $0x78] sm:$0xff] %v185
  %193 = vst [vmem:[#allocation2 + $0x80] sm:$0xff] %v187
  %194 = vst [vmem:[#allocation2 + $0x88] sm:$0xf] %v188
  %v195 = vld [vmem:[%s0] sm:$0xff]
  %v196 = vld [vmem:[%s0 + $0x8] sm:$0xff]
  %v197 = vld [vmem:[%s0 + $0x10] sm:$0xff]
  %201 = vrot.lane.b32.xlu0 %v195, 91
  %v202 = vpop.permute.xlu0 %201
  %203 = vrot.lane.b32.xlu0 %v196, 91
  %v204 = vpop.permute.xlu0 %203
  %205 = vrot.lane.b32.xlu0 %v197, 91
  %v206 = vpop.permute.xlu0 %205
  %v207 = vrot.slane %v202, 4
  %v208 = vrot.slane %v204, 4
  %v209 = vrot.slane %v206, 4
  %v210 = vsel %vm47, %v207, %v208
  %vm211 = vcmask 744448
  %v212 = vsel %vm211, %v202, %v210
  %v213 = vsel %vm47, %v208, %v209
  %v214 = vsel %vm211, %v204, %v213
  %v215 = vsel %vm211, %v206, %v209
  %219 = vst [vmem:[#allocation2 + $0x8c] sm:$0xff] %v212
  %220 = vst [vmem:[#allocation2 + $0x94] sm:$0xff] %v214
  %221 = vst [vmem:[#allocation2 + $0x9c] sm:$0xf] %v215
  %v222 = vld [vmem:[%s0] sm:$0xff]
  %v223 = vld [vmem:[%s0 + $0x8] sm:$0xff]
  %v224 = vld [vmem:[%s0 + $0x10] sm:$0xff]
  %228 = vrot.lane.b32.xlu0 %v222, 90
  %v229 = vpop.permute.xlu0 %228
  %230 = vrot.lane.b32.xlu0 %v223, 90
  %v231 = vpop.permute.xlu0 %230
  %232 = vrot.lane.b32.xlu0 %v224, 90
  %v233 = vpop.permute.xlu0 %232
  %v234 = vrot.slane %v229, 4
  %v235 = vrot.slane %v231, 4
  %v236 = vrot.slane %v233, 4
  %v237 = vsel %vm47, %v234, %v235
  %vm238 = vcmask 736256
  %v239 = vsel %vm238, %v229, %v237
  %v240 = vsel %vm47, %v235, %v236
  %v241 = vsel %vm238, %v231, %v240
  %v242 = vsel %vm238, %v233, %v236
  %246 = vst [vmem:[#allocation2 + $0xa0] sm:$0xff] %v239
  %247 = vst [vmem:[#allocation2 + $0xa8] sm:$0xff] %v241
  %248 = vst [vmem:[#allocation2 + $0xb0] sm:$0xf] %v242
  %v249 = vld [vmem:[%s3] sm:$0xf]
  %v250 = vld [vmem:[#allocation2] sm:$0xff]
  %v251 = vld [vmem:[#allocation2 + $0x8] sm:$0xff]
  %v252 = vld [vmem:[#allocation2 + $0x10] sm:$0xf]
  %v253 = vld [vmem:[#allocation2 + $0x14] sm:$0xff]
  %v254 = vld [vmem:[#allocation2 + $0x1c] sm:$0xff]
  %v255 = vld [vmem:[#allocation2 + $0x24] sm:$0xf]
  %v256 = vld [vmem:[#allocation2 + $0x28] sm:$0xff]
  %v257 = vld [vmem:[#allocation2 + $0x30] sm:$0xff]
  %v258 = vld [vmem:[#allocation2 + $0x38] sm:$0xf]
  %v259 = vld [vmem:[#allocation2 + $0x3c] sm:$0xff]
  %v260 = vld [vmem:[#allocation2 + $0x44] sm:$0xff]
  %v261 = vld [vmem:[#allocation2 + $0x4c] sm:$0xf]
  %v262 = vld [vmem:[#allocation2 + $0x50] sm:$0xff]
  %v263 = vld [vmem:[#allocation2 + $0x58] sm:$0xff]
  %v264 = vld [vmem:[#allocation2 + $0x60] sm:$0xf]
  %v265 = vld [vmem:[#allocation2 + $0x64] sm:$0xff]
  %v266 = vld [vmem:[#allocation2 + $0x6c] sm:$0xff]
  %v267 = vld [vmem:[#allocation2 + $0x74] sm:$0xf]
  %v268 = vld [vmem:[#allocation2 + $0x78] sm:$0xff]
  %v269 = vld [vmem:[#allocation2 + $0x80] sm:$0xff]
  %v270 = vld [vmem:[#allocation2 + $0x88] sm:$0xf]
  %v271 = vld [vmem:[#allocation2 + $0x8c] sm:$0xff]
  %v272 = vld [vmem:[#allocation2 + $0x94] sm:$0xff]
  %v273 = vld [vmem:[#allocation2 + $0x9c] sm:$0xf]
  %v274 = vld [vmem:[#allocation2 + $0xa0] sm:$0xff]
  %v275 = vld [vmem:[#allocation2 + $0xa8] sm:$0xff]
  %v276 = vld [vmem:[#allocation2 + $0xb0] sm:$0xf]
  %v304 = vunpack.c.l.b16 %v250
  %v305 = vunpack.c.h.b16 %v250
  %v306 = vunpack.c.l.b16 %v251
  %v307 = vunpack.c.h.b16 %v251
  %v308 = vunpack.c.l.b16 %v252
  %v309 = vunpack.c.l.b16 %v253
  %v310 = vunpack.c.h.b16 %v253
  %v311 = vunpack.c.l.b16 %v254
  %v312 = vunpack.c.h.b16 %v254
  %v313 = vunpack.c.l.b16 %v255
  %v314 = vunpack.c.l.b16 %v256
  %v315 = vunpack.c.h.b16 %v256
  %v316 = vunpack.c.l.b16 %v257
  %v317 = vunpack.c.h.b16 %v257
  %v318 = vunpack.c.l.b16 %v258
  %v319 = vunpack.c.l.b16 %v259
  %v320 = vunpack.c.h.b16 %v259
  %v321 = vunpack.c.l.b16 %v260
  %v322 = vunpack.c.h.b16 %v260
  %v323 = vunpack.c.l.b16 %v261
  %v324 = vunpack.c.l.b16 %v262
  %v325 = vunpack.c.h.b16 %v262
  %v326 = vunpack.c.l.b16 %v263
  %v327 = vunpack.c.h.b16 %v263
  %v328 = vunpack.c.l.b16 %v264
  %v329 = vunpack.c.l.b16 %v265
  %v330 = vunpack.c.h.b16 %v265
  %v331 = vunpack.c.l.b16 %v266
  %v332 = vunpack.c.h.b16 %v266
  %v333 = vunpack.c.l.b16 %v267
  %v334 = vunpack.c.l.b16 %v268
  %v335 = vunpack.c.h.b16 %v268
  %v336 = vunpack.c.l.b16 %v269
  %v337 = vunpack.c.h.b16 %v269
  %v338 = vunpack.c.l.b16 %v270
  %v339 = vunpack.c.l.b16 %v271
  %v340 = vunpack.c.h.b16 %v271
  %v341 = vunpack.c.l.b16 %v272
  %v342 = vunpack.c.h.b16 %v272
  %v343 = vunpack.c.l.b16 %v273
  %v344 = vunpack.c.l.b16 %v274
  %v345 = vunpack.c.h.b16 %v274
  %v346 = vunpack.c.l.b16 %v275
  %v347 = vunpack.c.h.b16 %v275
  %v348 = vunpack.c.l.b16 %v276
  %v349 = vpack.c.b16 %v309, %v304
  %v350 = vpack.c.b16 %v310, %v305
  %v351 = vpack.c.b16 %v311, %v306
  %v352 = vpack.c.b16 %v312, %v307
  %v353 = vpack.c.b16 %v313, %v308
  %v354 = vpack.c.b16 %v319, %v314
  %v355 = vpack.c.b16 %v320, %v315
  %v356 = vpack.c.b16 %v321, %v316
  %v357 = vpack.c.b16 %v322, %v317
  %v358 = vpack.c.b16 %v323, %v318
  %v359 = vpack.c.b16 %v329, %v324
  %v360 = vpack.c.b16 %v330, %v325
  %v361 = vpack.c.b16 %v331, %v326
  %v362 = vpack.c.b16 %v332, %v327
  %v363 = vpack.c.b16 %v333, %v328
  %v364 = vpack.c.b16 %v339, %v334
  %v365 = vpack.c.b16 %v340, %v335
  %v366 = vpack.c.b16 %v341, %v336
  %v367 = vpack.c.b16 %v342, %v337
  %v368 = vpack.c.b16 %v343, %v338
  %v369 = vpack.c.b16 %v344, %v344
  %v370 = vpack.c.b16 %v345, %v345
  %v371 = vpack.c.b16 %v346, %v346
  %v372 = vpack.c.b16 %v347, %v347
  %v373 = vpack.c.b16 %v348, %v348
  %vm394 = vcmask 588800
  %v396 = vsel %vm394, %v249, 0
  %vm398 = vcmask 1043456
  %v400 = vsel %vm398, %v369, 0
  %v403 = vsel %vm398, %v370, 0
  %v406 = vsel %vm398, %v371, 0
  %v409 = vsel %vm398, %v372, 0
  %v412 = vsel %vm398, %v373, 0
  %414 = vmatprep.subr.bf16.mxu0 0
  %415 = vmatpush1.bf16.msra.mxu0 0
  %416 = vmatprep.subr.bf16.mxu0 0
  %417 = vmatpush1.bf16.msra.mxu0 0
  %418 = vmatprep.subr.bf16.mxu0 0
  %419 = vmatpush1.bf16.msra.mxu0 0
  %420 = vmatprep.subr.bf16.mxu0 %v403
  %421 = vmatpush1.bf16.msra.mxu0 %v400
  %422 = vmatprep.subr.bf16.mxu0 %v365
  %423 = vmatpush1.bf16.msra.mxu0 %v364
  %424 = vmatprep.subr.bf16.mxu0 %v360
  %425 = vmatpush1.bf16.msra.mxu0 %v359
  %426 = vmatprep.subr.bf16.mxu0 %v355
  %427 = vmatpush1.bf16.msra.mxu0 %v354
  %428 = vmatprep.subr.bf16.mxu0 %v350
  %429 = vmatpush1.bf16.msra.mxu0 %v349
  %430 = vmatprep.subr.bf16.mxu0 0
  %431 = vmatpush2.bf16.msra.mxu0 0
  %432 = vmatprep.subr.bf16.mxu0 0
  %433 = vmatpush2.bf16.msra.mxu0 0
  %434 = vmatprep.subr.bf16.mxu0 0
  %435 = vmatpush2.bf16.msra.mxu0 0
  %436 = vmatprep.subr.bf16.mxu0 0
  %437 = vmatpush2.bf16.msra.mxu0 0
  %438 = vmatprep.subr.bf16.mxu0 0
  %439 = vmatpush2.bf16.msra.mxu0 0
  %440 = vmatprep.subr.bf16.mxu0 0
  %441 = vmatpush2.bf16.msra.mxu0 0
  %442 = vmatprep.subr.bf16.mxu0 0
  %443 = vmatpush2.bf16.msra.mxu0 0
  %444 = vmatprep.subr.bf16.mxu0 0
  %445 = vmatpush2.bf16.msra.mxu0 0
  %446 = vmatprep.mubr.bf16.mxu0 0
  %447 = vmatmul.mubr.bf16.gmra.mxu0 %v396
  %v448 = vpop.f32.mrf.mxu0
  %v449 = vadd.f32 0.0, %v448
  %v450 = vpop.f32.mrf.mxu0
  %v451 = vadd.f32 0.0, %v450
  %v452 = vpop.f32.mrf.mxu0
  %v453 = vpop.f32.mrf.mxu0
  %454 = vdwg.mxu0
  %455 = vmatprep.subr.bf16.mxu0 0
  %456 = vmatpush1.bf16.msra.mxu0 0
  %457 = vmatprep.subr.bf16.mxu0 0
  %458 = vmatpush1.bf16.msra.mxu0 0
  %459 = vmatprep.subr.bf16.mxu0 0
  %460 = vmatpush1.bf16.msra.mxu0 0
  %461 = vmatprep.subr.bf16.mxu0 %v409
  %462 = vmatpush1.bf16.msra.mxu0 %v406
  %463 = vmatprep.subr.bf16.mxu0 %v367
  %464 = vmatpush1.bf16.msra.mxu0 %v366
  %465 = vmatprep.subr.bf16.mxu0 %v362
  %466 = vmatpush1.bf16.msra.mxu0 %v361
  %467 = vmatprep.subr.bf16.mxu0 %v357
  %468 = vmatpush1.bf16.msra.mxu0 %v356
  %469 = vmatprep.subr.bf16.mxu0 %v352
  %470 = vmatpush1.bf16.msra.mxu0 %v351
  %471 = vmatprep.subr.bf16.mxu0 0
  %472 = vmatpush2.bf16.msra.mxu0 0
  %473 = vmatprep.subr.bf16.mxu0 0
  %474 = vmatpush2.bf16.msra.mxu0 0
  %475 = vmatprep.subr.bf16.mxu0 0
  %476 = vmatpush2.bf16.msra.mxu0 0
  %477 = vmatprep.subr.bf16.mxu0 0
  %478 = vmatpush2.bf16.msra.mxu0 0
  %479 = vmatprep.subr.bf16.mxu0 0
  %480 = vmatpush2.bf16.msra.mxu0 0
  %481 = vmatprep.subr.bf16.mxu0 0
  %482 = vmatpush2.bf16.msra.mxu0 0
  %483 = vmatprep.subr.bf16.mxu0 0
  %484 = vmatpush2.bf16.msra.mxu0 0
  %485 = vmatprep.subr.bf16.mxu0 0
  %486 = vmatpush2.bf16.msra.mxu0 0
  %487 = vmatprep.mubr.bf16.mxu0 0
  %488 = vmatmul.mubr.bf16.gmra.mxu0 %v396
  %v489 = vpop.f32.mrf.mxu0
  %v490 = vadd.f32 0.0, %v489
  %v491 = vpop.f32.mrf.mxu0
  %v492 = vadd.f32 0.0, %v491
  %v493 = vpop.f32.mrf.mxu0
  %v494 = vpop.f32.mrf.mxu0
  %495 = vdwg.mxu0
  %496 = vmatprep.subr.bf16.mxu0 0
  %497 = vmatpush1.bf16.msra.mxu0 0
  %498 = vmatprep.subr.bf16.mxu0 0
  %499 = vmatpush1.bf16.msra.mxu0 0
  %500 = vmatprep.subr.bf16.mxu0 0
  %501 = vmatpush1.bf16.msra.mxu0 0
  %502 = vmatprep.subr.bf16.mxu0 0
  %503 = vmatpush1.bf16.msra.mxu0 %v412
  %504 = vmatprep.subr.bf16.mxu0 0
  %505 = vmatpush1.bf16.msra.mxu0 %v368
  %506 = vmatprep.subr.bf16.mxu0 0
  %507 = vmatpush1.bf16.msra.mxu0 %v363
  %508 = vmatprep.subr.bf16.mxu0 0
  %509 = vmatpush1.bf16.msra.mxu0 %v358
  %510 = vmatprep.subr.bf16.mxu0 0
  %511 = vmatpush1.bf16.msra.mxu0 %v353
  %512 = vmatprep.subr.bf16.mxu0 0
  %513 = vmatpush2.bf16.msra.mxu0 0
  %514 = vmatprep.subr.bf16.mxu0 0
  %515 = vmatpush2.bf16.msra.mxu0 0
  %516 = vmatprep.subr.bf16.mxu0 0
  %517 = vmatpush2.bf16.msra.mxu0 0
  %518 = vmatprep.subr.bf16.mxu0 0
  %519 = vmatpush2.bf16.msra.mxu0 0
  %520 = vmatprep.subr.bf16.mxu0 0
  %521 = vmatpush2.bf16.msra.mxu0 0
  %522 = vmatprep.subr.bf16.mxu0 0
  %523 = vmatpush2.bf16.msra.mxu0 0
  %524 = vmatprep.subr.bf16.mxu0 0
  %525 = vmatpush2.bf16.msra.mxu0 0
  %526 = vmatprep.subr.bf16.mxu0 0
  %527 = vmatpush2.bf16.msra.mxu0 0
  %528 = vmatprep.mubr.bf16.mxu0 0
  %529 = vmatmul.mubr.bf16.gmra.mxu0 %v396
  %v530 = vpop.f32.mrf.mxu0
  %v531 = vadd.f32 0.0, %v530
  %v532 = vpop.f32.mrf.mxu0
  %v533 = vpop.f32.mrf.mxu0
  %v534 = vpop.f32.mrf.mxu0
  %535 = vdwg.mxu0
  %v537 = vlaneseq
  %v538 = vshrl.u32 %v537, 7
  %v539 = vsub.s32 0, %v538
  %v540 = vrot.slane %v24, %v539
  %v541 = vlaneseq
  %v542 = vshrl.u32 %v541, 7
  %v543 = vsub.s32 1, %v542
  %v544 = vrot.slane %v24, %v543
  %v545 = vlaneseq
  %v546 = vshrl.u32 %v545, 7
  %v547 = vsub.s32 2, %v546
  %v548 = vrot.slane %v24, %v547
  %v549 = vlaneseq
  %v550 = vshrl.u32 %v549, 7
  %v551 = vsub.s32 3, %v550
  %v552 = vrot.slane %v24, %v551
  %v553 = vlaneseq
  %v554 = vshrl.u32 %v553, 7
  %v555 = vsub.s32 4, %v554
  %v556 = vrot.slane %v24, %v555
  %v562 = vmul.f32 %v449, %v540
  %v563 = vmul.f32 %v451, %v544
  %v564 = vmul.f32 %v490, %v548
  %v565 = vmul.f32 %v492, %v552
  %v566 = vmul.f32 %v531, %v556
  %567 = vmatprep.subr.mxu0 0.0
  %568 = vmatpush1.msra.mxu0 1.0
  %569 = vmatprep.subr.mxu0 0.0
  %570 = vmatpush1.msra.mxu0 1.0
  %571 = vmatprep.subr.mxu0 0.0
  %572 = vmatpush1.msra.mxu0 1.0
  %573 = vmatprep.subr.mxu0 0.0
  %574 = vmatpush1.msra.mxu0 1.0
  %575 = vmatprep.subr.mxu0 0.0
  %576 = vmatpush1.msra.mxu0 1.0
  %577 = vmatprep.subr.mxu0 0.0
  %578 = vmatpush1.msra.mxu0 1.0
  %579 = vmatprep.subr.mxu0 0.0
  %580 = vmatpush1.msra.mxu0 1.0
  %581 = vmatprep.subr.mxu0 0.0
  %582 = vmatpush1.msra.mxu0 1.0
  %583 = vmatprep.subr.mxu0 0.0
  %584 = vmatpush1.msra.mxu0 1.0
  %585 = vmatprep.subr.mxu0 0.0
  %586 = vmatpush1.msra.mxu0 1.0
  %587 = vmatprep.subr.mxu0 0.0
  %588 = vmatpush1.msra.mxu0 1.0
  %589 = vmatprep.subr.mxu0 0.0
  %590 = vmatpush1.msra.mxu0 1.0
  %591 = vmatprep.subr.mxu0 0.0
  %592 = vmatpush1.msra.mxu0 1.0
  %593 = vmatprep.subr.mxu0 0.0
  %594 = vmatpush1.msra.mxu0 1.0
  %595 = vmatprep.subr.mxu0 0.0
  %596 = vmatpush1.msra.mxu0 1.0
  %597 = vmatprep.subr.mxu0 0.0
  %598 = vmatpush1.msra.mxu0 1.0
  %599 = vmatprep.subr.mxu0 0.0
  %600 = vmatpush2.msra.mxu0 1.0
  %601 = vmatprep.subr.mxu0 0.0
  %602 = vmatpush2.msra.mxu0 1.0
  %603 = vmatprep.subr.mxu0 0.0
  %604 = vmatpush2.msra.mxu0 1.0
  %605 = vmatprep.subr.mxu0 0.0
  %606 = vmatpush2.msra.mxu0 1.0
  %607 = vmatprep.subr.mxu0 0.0
  %608 = vmatpush2.msra.mxu0 1.0
  %609 = vmatprep.subr.mxu0 0.0
  %610 = vmatpush2.msra.mxu0 1.0
  %611 = vmatprep.subr.mxu0 0.0
  %612 = vmatpush2.msra.mxu0 1.0
  %613 = vmatprep.subr.mxu0 0.0
  %614 = vmatpush2.msra.mxu0 1.0
  %615 = vmatprep.subr.mxu0 0.0
  %616 = vmatpush2.msra.mxu0 1.0
  %617 = vmatprep.subr.mxu0 0.0
  %618 = vmatpush2.msra.mxu0 1.0
  %619 = vmatprep.subr.mxu0 0.0
  %620 = vmatpush2.msra.mxu0 1.0
  %621 = vmatprep.subr.mxu0 0.0
  %622 = vmatpush2.msra.mxu0 1.0
  %623 = vmatprep.subr.mxu0 0.0
  %624 = vmatpush2.msra.mxu0 1.0
  %625 = vmatprep.subr.mxu0 0.0
  %626 = vmatpush2.msra.mxu0 1.0
  %627 = vmatprep.subr.mxu0 0.0
  %628 = vmatpush2.msra.mxu0 1.0
  %629 = vmatprep.subr.mxu0 0.0
  %630 = vmatpush2.msra.mxu0 1.0
  %631 = vmatprep.mubr.f32.mxu0 %v563
  %632 = vmatmul.mubr.f32.gmra.mxu0 %v562
  %v633 = vpop.f32.mrf.mxu0
  %v634 = vadd.f32 0.0, %v633
  %v635 = vpop.f32.mrf.mxu0
  %636 = vdwg.mxu0
  %637 = vmatprep.subr.mxu0 0.0
  %638 = vmatpush1.msra.mxu0 1.0
  %639 = vmatprep.subr.mxu0 0.0
  %640 = vmatpush1.msra.mxu0 1.0
  %641 = vmatprep.subr.mxu0 0.0
  %642 = vmatpush1.msra.mxu0 1.0
  %643 = vmatprep.subr.mxu0 0.0
  %644 = vmatpush1.msra.mxu0 1.0
  %645 = vmatprep.subr.mxu0 0.0
  %646 = vmatpush1.msra.mxu0 1.0
  %647 = vmatprep.subr.mxu0 0.0
  %648 = vmatpush1.msra.mxu0 1.0
  %649 = vmatprep.subr.mxu0 0.0
  %650 = vmatpush1.msra.mxu0 1.0
  %651 = vmatprep.subr.mxu0 0.0
  %652 = vmatpush1.msra.mxu0 1.0
  %653 = vmatprep.subr.mxu0 0.0
  %654 = vmatpush1.msra.mxu0 1.0
  %655 = vmatprep.subr.mxu0 0.0
  %656 = vmatpush1.msra.mxu0 1.0
  %657 = vmatprep.subr.mxu0 0.0
  %658 = vmatpush1.msra.mxu0 1.0
  %659 = vmatprep.subr.mxu0 0.0
  %660 = vmatpush1.msra.mxu0 1.0
  %661 = vmatprep.subr.mxu0 0.0
  %662 = vmatpush1.msra.mxu0 1.0
  %663 = vmatprep.subr.mxu0 0.0
  %664 = vmatpush1.msra.mxu0 1.0
  %665 = vmatprep.subr.mxu0 0.0
  %666 = vmatpush1.msra.mxu0 1.0
  %667 = vmatprep.subr.mxu0 0.0
  %668 = vmatpush1.msra.mxu0 1.0
  %669 = vmatprep.subr.mxu0 0.0
  %670 = vmatpush2.msra.mxu0 1.0
  %671 = vmatprep.subr.mxu0 0.0
  %672 = vmatpush2.msra.mxu0 1.0
  %673 = vmatprep.subr.mxu0 0.0
  %674 = vmatpush2.msra.mxu0 1.0
  %675 = vmatprep.subr.mxu0 0.0
  %676 = vmatpush2.msra.mxu0 1.0
  %677 = vmatprep.subr.mxu0 0.0
  %678 = vmatpush2.msra.mxu0 1.0
  %679 = vmatprep.subr.mxu0 0.0
  %680 = vmatpush2.msra.mxu0 1.0
  %681 = vmatprep.subr.mxu0 0.0
  %682 = vmatpush2.msra.mxu0 1.0
  %683 = vmatprep.subr.mxu0 0.0
  %684 = vmatpush2.msra.mxu0 1.0
  %685 = vmatprep.subr.mxu0 0.0
  %686 = vmatpush2.msra.mxu0 1.0
  %687 = vmatprep.subr.mxu0 0.0
  %688 = vmatpush2.msra.mxu0 1.0
  %689 = vmatprep.subr.mxu0 0.0
  %690 = vmatpush2.msra.mxu0 1.0
  %691 = vmatprep.subr.mxu0 0.0
  %692 = vmatpush2.msra.mxu0 1.0
  %693 = vmatprep.subr.mxu0 0.0
  %694 = vmatpush2.msra.mxu0 1.0
  %695 = vmatprep.subr.mxu0 0.0
  %696 = vmatpush2.msra.mxu0 1.0
  %697 = vmatprep.subr.mxu0 0.0
  %698 = vmatpush2.msra.mxu0 1.0
  %699 = vmatprep.subr.mxu0 0.0
  %700 = vmatpush2.msra.mxu0 1.0
  %701 = vmatprep.mubr.f32.mxu0 %v565
  %702 = vmatmul.mubr.f32.gmra.mxu0 %v564
  %v703 = vpop.f32.mrf.mxu0
  %v704 = vadd.f32 %v634, %v703
  %v705 = vpop.f32.mrf.mxu0
  %706 = vdwg.mxu0
  %707 = vmatprep.subr.mxu0 0.0
  %708 = vmatpush1.msra.mxu0 1.0
  %709 = vmatprep.subr.mxu0 0.0
  %710 = vmatpush1.msra.mxu0 1.0
  %711 = vmatprep.subr.mxu0 0.0
  %712 = vmatpush1.msra.mxu0 1.0
  %713 = vmatprep.subr.mxu0 0.0
  %714 = vmatpush1.msra.mxu0 1.0
  %715 = vmatprep.subr.mxu0 0.0
  %716 = vmatpush1.msra.mxu0 1.0
  %717 = vmatprep.subr.mxu0 0.0
  %718 = vmatpush1.msra.mxu0 1.0
  %719 = vmatprep.subr.mxu0 0.0
  %720 = vmatpush1.msra.mxu0 1.0
  %721 = vmatprep.subr.mxu0 0.0
  %722 = vmatpush1.msra.mxu0 1.0
  %723 = vmatprep.subr.mxu0 0.0
  %724 = vmatpush1.msra.mxu0 1.0
  %725 = vmatprep.subr.mxu0 0.0
  %726 = vmatpush1.msra.mxu0 1.0
  %727 = vmatprep.subr.mxu0 0.0
  %728 = vmatpush1.msra.mxu0 1.0
  %729 = vmatprep.subr.mxu0 0.0
  %730 = vmatpush1.msra.mxu0 1.0
  %731 = vmatprep.subr.mxu0 0.0
  %732 = vmatpush1.msra.mxu0 1.0
  %733 = vmatprep.subr.mxu0 0.0
  %734 = vmatpush1.msra.mxu0 1.0
  %735 = vmatprep.subr.mxu0 0.0
  %736 = vmatpush1.msra.mxu0 1.0
  %737 = vmatprep.subr.mxu0 0.0
  %738 = vmatpush1.msra.mxu0 1.0
  %739 = vmatprep.subr.mxu0 0.0
  %740 = vmatpush2.msra.mxu0 0.0
  %741 = vmatprep.subr.mxu0 0.0
  %742 = vmatpush2.msra.mxu0 0.0
  %743 = vmatprep.subr.mxu0 0.0
  %744 = vmatpush2.msra.mxu0 0.0
  %745 = vmatprep.subr.mxu0 0.0
  %746 = vmatpush2.msra.mxu0 0.0
  %747 = vmatprep.subr.mxu0 0.0
  %748 = vmatpush2.msra.mxu0 0.0
  %749 = vmatprep.subr.mxu0 0.0
  %750 = vmatpush2.msra.mxu0 0.0
  %751 = vmatprep.subr.mxu0 0.0
  %752 = vmatpush2.msra.mxu0 0.0
  %753 = vmatprep.subr.mxu0 0.0
  %754 = vmatpush2.msra.mxu0 0.0
  %755 = vmatprep.subr.mxu0 0.0
  %756 = vmatpush2.msra.mxu0 0.0
  %757 = vmatprep.subr.mxu0 0.0
  %758 = vmatpush2.msra.mxu0 0.0
  %759 = vmatprep.subr.mxu0 0.0
  %760 = vmatpush2.msra.mxu0 0.0
  %761 = vmatprep.subr.mxu0 0.0
  %762 = vmatpush2.msra.mxu0 0.0
  %763 = vmatprep.subr.mxu0 0.0
  %764 = vmatpush2.msra.mxu0 0.0
  %765 = vmatprep.subr.mxu0 0.0
  %766 = vmatpush2.msra.mxu0 0.0
  %767 = vmatprep.subr.mxu0 0.0
  %768 = vmatpush2.msra.mxu0 0.0
  %769 = vmatprep.subr.mxu0 0.0
  %770 = vmatpush2.msra.mxu0 0.0
  %771 = vmatprep.mubr.f32.mxu0 0.0
  %772 = vmatmul.mubr.f32.gmra.mxu0 %v566
  %v773 = vpop.f32.mrf.mxu0
  %v774 = vadd.f32 %v704, %v773
  %v775 = vpop.f32.mrf.mxu0
  %776 = vdwg.mxu0
  %v777 = vmul.f32 %v774, 0.001953125
  %779 = vset.pattern.permute.xlu0 0
  %780 = vperm.xlu0 %779, %v777
  %v781 = vpop.permute.xlu0 %780
  %v783 = vsub.f32 %v449, %v781
  %v784 = vsub.f32 %v451, %v781
  %v785 = vsub.f32 %v490, %v781
  %v786 = vsub.f32 %v492, %v781
  %v787 = vsub.f32 %v531, %v781
  %v788 = vmul.f32 %v783, %v540
  %v789 = vmul.f32 %v784, %v544
  %v790 = vmul.f32 %v785, %v548
  %v791 = vmul.f32 %v786, %v552
  %v792 = vmul.f32 %v787, %v556
  %v793 = vmul.f32 %v788, %v788
  %v794 = vmul.f32 %v789, %v789
  %v795 = vmul.f32 %v790, %v790
  %v796 = vmul.f32 %v791, %v791
  %v797 = vmul.f32 %v792, %v792
  %798 = vmatprep.subr.mxu0 0.0
  %799 = vmatpush1.msra.mxu0 1.0
  %800 = vmatprep.subr.mxu0 0.0
  %801 = vmatpush1.msra.mxu0 1.0
  %802 = vmatprep.subr.mxu0 0.0
  %803 = vmatpush1.msra.mxu0 1.0
  %804 = vmatprep.subr.mxu0 0.0
  %805 = vmatpush1.msra.mxu0 1.0
  %806 = vmatprep.subr.mxu0 0.0
  %807 = vmatpush1.msra.mxu0 1.0
  %808 = vmatprep.subr.mxu0 0.0
  %809 = vmatpush1.msra.mxu0 1.0
  %810 = vmatprep.subr.mxu0 0.0
  %811 = vmatpush1.msra.mxu0 1.0
  %812 = vmatprep.subr.mxu0 0.0
  %813 = vmatpush1.msra.mxu0 1.0
  %814 = vmatprep.subr.mxu0 0.0
  %815 = vmatpush1.msra.mxu0 1.0
  %816 = vmatprep.subr.mxu0 0.0
  %817 = vmatpush1.msra.mxu0 1.0
  %818 = vmatprep.subr.mxu0 0.0
  %819 = vmatpush1.msra.mxu0 1.0
  %820 = vmatprep.subr.mxu0 0.0
  %821 = vmatpush1.msra.mxu0 1.0
  %822 = vmatprep.subr.mxu0 0.0
  %823 = vmatpush1.msra.mxu0 1.0
  %824 = vmatprep.subr.mxu0 0.0
  %825 = vmatpush1.msra.mxu0 1.0
  %826 = vmatprep.subr.mxu0 0.0
  %827 = vmatpush1.msra.mxu0 1.0
  %828 = vmatprep.subr.mxu0 0.0
  %829 = vmatpush1.msra.mxu0 1.0
  %830 = vmatprep.subr.mxu0 0.0
  %831 = vmatpush2.msra.mxu0 1.0
  %832 = vmatprep.subr.mxu0 0.0
  %833 = vmatpush2.msra.mxu0 1.0
  %834 = vmatprep.subr.mxu0 0.0
  %835 = vmatpush2.msra.mxu0 1.0
  %836 = vmatprep.subr.mxu0 0.0
  %837 = vmatpush2.msra.mxu0 1.0
  %838 = vmatprep.subr.mxu0 0.0
  %839 = vmatpush2.msra.mxu0 1.0
  %840 = vmatprep.subr.mxu0 0.0
  %841 = vmatpush2.msra.mxu0 1.0
  %842 = vmatprep.subr.mxu0 0.0
  %843 = vmatpush2.msra.mxu0 1.0
  %844 = vmatprep.subr.mxu0 0.0
  %845 = vmatpush2.msra.mxu0 1.0
  %846 = vmatprep.subr.mxu0 0.0
  %847 = vmatpush2.msra.mxu0 1.0
  %848 = vmatprep.subr.mxu0 0.0
  %849 = vmatpush2.msra.mxu0 1.0
  %850 = vmatprep.subr.mxu0 0.0
  %851 = vmatpush2.msra.mxu0 1.0
  %852 = vmatprep.subr.mxu0 0.0
  %853 = vmatpush2.msra.mxu0 1.0
  %854 = vmatprep.subr.mxu0 0.0
  %855 = vmatpush2.msra.mxu0 1.0
  %856 = vmatprep.subr.mxu0 0.0
  %857 = vmatpush2.msra.mxu0 1.0
  %858 = vmatprep.subr.mxu0 0.0
  %859 = vmatpush2.msra.mxu0 1.0
  %860 = vmatprep.subr.mxu0 0.0
  %861 = vmatpush2.msra.mxu0 1.0
  %862 = vmatprep.mubr.f32.mxu0 %v794
  %863 = vmatmul.mubr.f32.gmra.mxu0 %v793
  %v864 = vpop.f32.mrf.mxu0
  %v865 = vadd.f32 0.0, %v864
  %v866 = vpop.f32.mrf.mxu0
  %867 = vdwg.mxu0
  %868 = vmatprep.subr.mxu0 0.0
  %869 = vmatpush1.msra.mxu0 1.0
  %870 = vmatprep.subr.mxu0 0.0
  %871 = vmatpush1.msra.mxu0 1.0
  %872 = vmatprep.subr.mxu0 0.0
  %873 = vmatpush1.msra.mxu0 1.0
  %874 = vmatprep.subr.mxu0 0.0
  %875 = vmatpush1.msra.mxu0 1.0
  %876 = vmatprep.subr.mxu0 0.0
  %877 = vmatpush1.msra.mxu0 1.0
  %878 = vmatprep.subr.mxu0 0.0
  %879 = vmatpush1.msra.mxu0 1.0
  %880 = vmatprep.subr.mxu0 0.0
  %881 = vmatpush1.msra.mxu0 1.0
  %882 = vmatprep.subr.mxu0 0.0
  %883 = vmatpush1.msra.mxu0 1.0
  %884 = vmatprep.subr.mxu0 0.0
  %885 = vmatpush1.msra.mxu0 1.0
  %886 = vmatprep.subr.mxu0 0.0
  %887 = vmatpush1.msra.mxu0 1.0
  %888 = vmatprep.subr.mxu0 0.0
  %889 = vmatpush1.msra.mxu0 1.0
  %890 = vmatprep.subr.mxu0 0.0
  %891 = vmatpush1.msra.mxu0 1.0
  %892 = vmatprep.subr.mxu0 0.0
  %893 = vmatpush1.msra.mxu0 1.0
  %894 = vmatprep.subr.mxu0 0.0
  %895 = vmatpush1.msra.mxu0 1.0
  %896 = vmatprep.subr.mxu0 0.0
  %897 = vmatpush1.msra.mxu0 1.0
  %898 = vmatprep.subr.mxu0 0.0
  %899 = vmatpush1.msra.mxu0 1.0
  %900 = vmatprep.subr.mxu0 0.0
  %901 = vmatpush2.msra.mxu0 1.0
  %902 = vmatprep.subr.mxu0 0.0
  %903 = vmatpush2.msra.mxu0 1.0
  %904 = vmatprep.subr.mxu0 0.0
  %905 = vmatpush2.msra.mxu0 1.0
  %906 = vmatprep.subr.mxu0 0.0
  %907 = vmatpush2.msra.mxu0 1.0
  %908 = vmatprep.subr.mxu0 0.0
  %909 = vmatpush2.msra.mxu0 1.0
  %910 = vmatprep.subr.mxu0 0.0
  %911 = vmatpush2.msra.mxu0 1.0
  %912 = vmatprep.subr.mxu0 0.0
  %913 = vmatpush2.msra.mxu0 1.0
  %914 = vmatprep.subr.mxu0 0.0
  %915 = vmatpush2.msra.mxu0 1.0
  %916 = vmatprep.subr.mxu0 0.0
  %917 = vmatpush2.msra.mxu0 1.0
  %918 = vmatprep.subr.mxu0 0.0
  %919 = vmatpush2.msra.mxu0 1.0
  %920 = vmatprep.subr.mxu0 0.0
  %921 = vmatpush2.msra.mxu0 1.0
  %922 = vmatprep.subr.mxu0 0.0
  %923 = vmatpush2.msra.mxu0 1.0
  %924 = vmatprep.subr.mxu0 0.0
  %925 = vmatpush2.msra.mxu0 1.0
  %926 = vmatprep.subr.mxu0 0.0
  %927 = vmatpush2.msra.mxu0 1.0
  %928 = vmatprep.subr.mxu0 0.0
  %929 = vmatpush2.msra.mxu0 1.0
  %930 = vmatprep.subr.mxu0 0.0
  %931 = vmatpush2.msra.mxu0 1.0
  %932 = vmatprep.mubr.f32.mxu0 %v796
  %933 = vmatmul.mubr.f32.gmra.mxu0 %v795
  %v934 = vpop.f32.mrf.mxu0
  %v935 = vadd.f32 %v865, %v934
  %v936 = vpop.f32.mrf.mxu0
  %937 = vdwg.mxu0
  %938 = vmatprep.subr.mxu0 0.0
  %939 = vmatpush1.msra.mxu0 1.0
  %940 = vmatprep.subr.mxu0 0.0
  %941 = vmatpush1.msra.mxu0 1.0
  %942 = vmatprep.subr.mxu0 0.0
  %943 = vmatpush1.msra.mxu0 1.0
  %944 = vmatprep.subr.mxu0 0.0
  %945 = vmatpush1.msra.mxu0 1.0
  %946 = vmatprep.subr.mxu0 0.0
  %947 = vmatpush1.msra.mxu0 1.0
  %948 = vmatprep.subr.mxu0 0.0
  %949 = vmatpush1.msra.mxu0 1.0
  %950 = vmatprep.subr.mxu0 0.0
  %951 = vmatpush1.msra.mxu0 1.0
  %952 = vmatprep.subr.mxu0 0.0
  %953 = vmatpush1.msra.mxu0 1.0
  %954 = vmatprep.subr.mxu0 0.0
  %955 = vmatpush1.msra.mxu0 1.0
  %956 = vmatprep.subr.mxu0 0.0
  %957 = vmatpush1.msra.mxu0 1.0
  %958 = vmatprep.subr.mxu0 0.0
  %959 = vmatpush1.msra.mxu0 1.0
  %960 = vmatprep.subr.mxu0 0.0
  %961 = vmatpush1.msra.mxu0 1.0
  %962 = vmatprep.subr.mxu0 0.0
  %963 = vmatpush1.msra.mxu0 1.0
  %964 = vmatprep.subr.mxu0 0.0
  %965 = vmatpush1.msra.mxu0 1.0
  %966 = vmatprep.subr.mxu0 0.0
  %967 = vmatpush1.msra.mxu0 1.0
  %968 = vmatprep.subr.mxu0 0.0
  %969 = vmatpush1.msra.mxu0 1.0
  %970 = vmatprep.subr.mxu0 0.0
  %971 = vmatpush2.msra.mxu0 0.0
  %972 = vmatprep.subr.mxu0 0.0
  %973 = vmatpush2.msra.mxu0 0.0
  %974 = vmatprep.subr.mxu0 0.0
  %975 = vmatpush2.msra.mxu0 0.0
  %976 = vmatprep.subr.mxu0 0.0
  %977 = vmatpush2.msra.mxu0 0.0
  %978 = vmatprep.subr.mxu0 0.0
  %979 = vmatpush2.msra.mxu0 0.0
  %980 = vmatprep.subr.mxu0 0.0
  %981 = vmatpush2.msra.mxu0 0.0
  %982 = vmatprep.subr.mxu0 0.0
  %983 = vmatpush2.msra.mxu0 0.0
  %984 = vmatprep.subr.mxu0 0.0
  %985 = vmatpush2.msra.mxu0 0.0
  %986 = vmatprep.subr.mxu0 0.0
  %987 = vmatpush2.msra.mxu0 0.0
  %988 = vmatprep.subr.mxu0 0.0
  %989 = vmatpush2.msra.mxu0 0.0
  %990 = vmatprep.subr.mxu0 0.0
  %991 = vmatpush2.msra.mxu0 0.0
  %992 = vmatprep.subr.mxu0 0.0
  %993 = vmatpush2.msra.mxu0 0.0
  %994 = vmatprep.subr.mxu0 0.0
  %995 = vmatpush2.msra.mxu0 0.0
  %996 = vmatprep.subr.mxu0 0.0
  %997 = vmatpush2.msra.mxu0 0.0
  %998 = vmatprep.subr.mxu0 0.0
  %999 = vmatpush2.msra.mxu0 0.0
  %1000 = vmatprep.subr.mxu0 0.0
  %1001 = vmatpush2.msra.mxu0 0.0
  %1002 = vmatprep.mubr.f32.mxu0 0.0
  %1003 = vmatmul.mubr.f32.gmra.mxu0 %v797
  %v1004 = vpop.f32.mrf.mxu0
  %v1005 = vadd.f32 %v935, %v1004
  %v1006 = vpop.f32.mrf.mxu0
  %1007 = vdwg.mxu0
  %v1008 = vmul.f32 %v1005, 0.001953125
  %v1009 = vadd.f32 %v1008, 1e-05
  %v1010 = vrsqrt.pop %v1009
  %v1011 = vmul.f32 %v1010, %v25
  %1013 = vset.pattern.permute.xlu0 0
  %1014 = vperm.xlu0 %1013, %v1011
  %v1015 = vpop.permute.xlu0 %1014
  %v1017 = vmul.f32 %v783, %v1015
  %v1018 = vmul.f32 %v784, %v1015
  %v1019 = vmul.f32 %v785, %v1015
  %v1020 = vmul.f32 %v786, %v1015
  %v1021 = vmul.f32 %v787, %v1015
  %1023 = vset.pattern.permute.xlu0 1
  %1024 = vperm.xlu0 %1023, %v25
  %v1025 = vpop.permute.xlu0 %1024
  %v1027 = vadd.f32 %v1017, %v1025
  %v1028 = vadd.f32 %v1018, %v1025
  %v1029 = vadd.f32 %v1019, %v1025
  %v1030 = vadd.f32 %v1020, %v1025
  %v1031 = vadd.f32 %v1021, %v1025
  %v1032 = vmax.f32 %v1027, 0.0
  %v1033 = vmax.f32 %v1028, 0.0
  %v1034 = vmax.f32 %v1029, 0.0
  %v1035 = vmax.f32 %v1030, 0.0
  %v1036 = vmax.f32 %v1031, 0.0
  %v1037 = vmul.f32 %v1032, %v540
  %v1038 = vmul.f32 %v1033, %v544
  %v1039 = vmul.f32 %v1034, %v548
  %v1040 = vmul.f32 %v1035, %v552
  %v1041 = vmul.f32 %v1036, %v556
  %vm1042 = vcmask 150528
  %1043 = vst.msk [vmem:[#allocation3] sm:$0xf] %vm1042, 0
  %vm1044 = vcmask 306328
  %1045 = vst.msk [vmem:[#allocation3 + $0x14] sm:$0xf] %vm1044, 0
  %v1046 = vpack.c.bf16 %v1037, %v1037
  %v1047 = vpack.c.bf16 %v1038, %v1038
  %v1048 = vpack.c.bf16 %v1039, %v1039
  %v1049 = vpack.c.bf16 %v1040, %v1040
  %v1050 = vpack.c.bf16 %v1041, %v1041
  %v1056 = vunpack.c.l.b16 %v1046
  %v1057 = vunpack.c.l.b16 %v1047
  %v1058 = vunpack.c.l.b16 %v1048
  %v1059 = vunpack.c.l.b16 %v1049
  %v1060 = vunpack.c.l.b16 %v1050
  %v1061 = vpack.c.b16 %v1057, %v1056
  %v1062 = vpack.c.b16 %v1059, %v1058
  %v1063 = vpack.c.b16 %v1060, %v1060
  %1064 = vrot.lane.b32.xlu0 %v1061, 19
  %v1065 = vpop.permute.xlu0 %1064
  %1066 = vrot.lane.b32.xlu0 %v1062, 19
  %v1067 = vpop.permute.xlu0 %1066
  %1068 = vrot.lane.b32.xlu0 %v1063, 19
  %v1069 = vpop.permute.xlu0 %1068
  %v1070 = vrot.slane %v1065, 4
  %v1071 = vrot.slane %v1067, 4
  %v1072 = vrot.slane %v1069, 4
  %vm1073 = vcmask 154624
  %v1074 = vsel %vm1073, %v1070, %v1065
  %v1075 = vsel %vm47, %v1070, %v1071
  %v1076 = vsel %vm1073, %v1075, %v1067
  %v1077 = vsel %vm47, %v1071, %v1072
  %v1078 = vsel %vm1073, %v1077, %v1069
  %vm1082 = vcmask 1043608
  %vm1083 = vcmask 1047556
  %vm1084 = vmor %vm1083, %vm1082
  %1085 = vst.msk [vmem:[#allocation3] sm:$0xff] %vm1084, %v1074
  %1086 = vst [vmem:[#allocation3 + $0x8] sm:$0xff] %v1076
  %vm1087 = vcmask 154628
  %vm1088 = vmor %vm1087, %vm398
  %1089 = vst.msk [vmem:[#allocation3 + $0x10] sm:$0xff] %vm1088, %v1078
  %v1090 = vld [vmem:[#allocation3] sm:$0xff]
  %v1091 = vld [vmem:[#allocation3 + $0x8] sm:$0xff]
  %v1092 = vld [vmem:[#allocation3 + $0x10] sm:$0xf]
  %1093 = vst [vmem:[#allocation2] sm:$0xff] %v1090
  %1094 = vst [vmem:[#allocation2 + $0x8] sm:$0xff] %v1091
  %1095 = vst [vmem:[#allocation2 + $0x10] sm:$0xf] %v1092
  %v1096 = vld [vmem:[#allocation3] sm:$0xff]
  %v1097 = vld [vmem:[#allocation3 + $0x8] sm:$0xff]
  %v1098 = vld [vmem:[#allocation3 + $0x10] sm:$0xff]
  %1102 = vrot.lane.b32.xlu0 %v1096, 127
  %v1103 = vpop.permute.xlu0 %1102
  %1104 = vrot.lane.b32.xlu0 %v1097, 127
  %v1105 = vpop.permute.xlu0 %1104
  %1106 = vrot.lane.b32.xlu0 %v1098, 127
  %v1107 = vpop.permute.xlu0 %1106
  %v1108 = vrot.slane %v1103, 4
  %v1109 = vrot.slane %v1105, 4
  %v1110 = vrot.slane %v1107, 4
  %v1111 = vsel %vm47, %v1108, %v1109
  %v1112 = vsel %vm49, %v1103, %v1111
  %v1113 = vsel %vm47, %v1109, %v1110
  %v1114 = vsel %vm49, %v1105, %v1113
  %v1115 = vsel %vm49, %v1107, %v1110
  %1119 = vst [vmem:[#allocation2 + $0x14] sm:$0xff] %v1112
  %1120 = vst [vmem:[#allocation2 + $0x1c] sm:$0xff] %v1114
  %1121 = vst [vmem:[#allocation2 + $0x24] sm:$0xf] %v1115
  %v1122 = vld [vmem:[#allocation3] sm:$0xff]
  %v1123 = vld [vmem:[#allocation3 + $0x8] sm:$0xff]
  %v1124 = vld [vmem:[#allocation3 + $0x10] sm:$0xff]
  %1128 = vrot.lane.b32.xlu0 %v1122, 126
  %v1129 = vpop.permute.xlu0 %1128
  %1130 = vrot.lane.b32.xlu0 %v1123, 126
  %v1131 = vpop.permute.xlu0 %1130
  %1132 = vrot.lane.b32.xlu0 %v1124, 126
  %v1133 = vpop.permute.xlu0 %1132
  %v1134 = vrot.slane %v1129, 4
  %v1135 = vrot.slane %v1131, 4
  %v1136 = vrot.slane %v1133, 4
  %v1137 = vsel %vm47, %v1134, %v1135
  %v1138 = vsel %vm76, %v1129, %v1137
  %v1139 = vsel %vm47, %v1135, %v1136
  %v1140 = vsel %vm76, %v1131, %v1139
  %v1141 = vsel %vm76, %v1133, %v1136
  %1145 = vst [vmem:[#allocation2 + $0x28] sm:$0xff] %v1138
  %1146 = vst [vmem:[#allocation2 + $0x30] sm:$0xff] %v1140
  %1147 = vst [vmem:[#allocation2 + $0x38] sm:$0xf] %v1141
  %v1148 = vld [vmem:[#allocation3] sm:$0xff]
  %v1149 = vld [vmem:[#allocation3 + $0x8] sm:$0xff]
  %v1150 = vld [vmem:[#allocation3 + $0x10] sm:$0xff]
  %1154 = vrot.lane.b32.xlu0 %v1148, 110
  %v1155 = vpop.permute.xlu0 %1154
  %1156 = vrot.lane.b32.xlu0 %v1149, 110
  %v1157 = vpop.permute.xlu0 %1156
  %1158 = vrot.lane.b32.xlu0 %v1150, 110
  %v1159 = vpop.permute.xlu0 %1158
  %v1160 = vrot.slane %v1155, 4
  %v1161 = vrot.slane %v1157, 4
  %v1162 = vrot.slane %v1159, 4
  %v1163 = vsel %vm47, %v1160, %v1161
  %v1164 = vsel %vm103, %v1155, %v1163
  %v1165 = vsel %vm47, %v1161, %v1162
  %v1166 = vsel %vm103, %v1157, %v1165
  %v1167 = vsel %vm103, %v1159, %v1162
  %1171 = vst [vmem:[#allocation2 + $0x3c] sm:$0xff] %v1164
  %1172 = vst [vmem:[#allocation2 + $0x44] sm:$0xff] %v1166
  %1173 = vst [vmem:[#allocation2 + $0x4c] sm:$0xf] %v1167
  %v1174 = vld [vmem:[#allocation3] sm:$0xff]
  %v1175 = vld [vmem:[#allocation3 + $0x8] sm:$0xff]
  %v1176 = vld [vmem:[#allocation3 + $0x10] sm:$0xff]
  %1180 = vrot.lane.b32.xlu0 %v1174, 109
  %v1181 = vpop.permute.xlu0 %1180
  %1182 = vrot.lane.b32.xlu0 %v1175, 109
  %v1183 = vpop.permute.xlu0 %1182
  %1184 = vrot.lane.b32.xlu0 %v1176, 109
  %v1185 = vpop.permute.xlu0 %1184
  %v1186 = vrot.slane %v1181, 4
  %v1187 = vrot.slane %v1183, 4
  %v1188 = vrot.slane %v1185, 4
  %v1189 = vsel %vm47, %v1186, %v1187
  %v1190 = vsel %vm130, %v1181, %v1189
  %v1191 = vsel %vm47, %v1187, %v1188
  %v1192 = vsel %vm130, %v1183, %v1191
  %v1193 = vsel %vm130, %v1185, %v1188
  %1197 = vst [vmem:[#allocation2 + $0x50] sm:$0xff] %v1190
  %1198 = vst [vmem:[#allocation2 + $0x58] sm:$0xff] %v1192
  %1199 = vst [vmem:[#allocation2 + $0x60] sm:$0xf] %v1193
  %v1200 = vld [vmem:[#allocation3] sm:$0xff]
  %v1201 = vld [vmem:[#allocation3 + $0x8] sm:$0xff]
  %v1202 = vld [vmem:[#allocation3 + $0x10] sm:$0xff]
  %1206 = vrot.lane.b32.xlu0 %v1200, 108
  %v1207 = vpop.permute.xlu0 %1206
  %1208 = vrot.lane.b32.xlu0 %v1201, 108
  %v1209 = vpop.permute.xlu0 %1208
  %1210 = vrot.lane.b32.xlu0 %v1202, 108
  %v1211 = vpop.permute.xlu0 %1210
  %v1212 = vrot.slane %v1207, 4
  %v1213 = vrot.slane %v1209, 4
  %v1214 = vrot.slane %v1211, 4
  %v1215 = vsel %vm47, %v1212, %v1213
  %v1216 = vsel %vm157, %v1207, %v1215
  %v1217 = vsel %vm47, %v1213, %v1214
  %v1218 = vsel %vm157, %v1209, %v1217
  %v1219 = vsel %vm157, %v1211, %v1214
  %1223 = vst [vmem:[#allocation2 + $0x64] sm:$0xff] %v1216
  %1224 = vst [vmem:[#allocation2 + $0x6c] sm:$0xff] %v1218
  %1225 = vst [vmem:[#allocation2 + $0x74] sm:$0xf] %v1219
  %v1226 = vld [vmem:[#allocation3] sm:$0xff]
  %v1227 = vld [vmem:[#allocation3 + $0x8] sm:$0xff]
  %v1228 = vld [vmem:[#allocation3 + $0x10] sm:$0xff]
  %1232 = vrot.lane.b32.xlu0 %v1226, 92
  %v1233 = vpop.permute.xlu0 %1232
  %1234 = vrot.lane.b32.xlu0 %v1227, 92
  %v1235 = vpop.permute.xlu0 %1234
  %1236 = vrot.lane.b32.xlu0 %v1228, 92
  %v1237 = vpop.permute.xlu0 %1236
  %v1238 = vrot.slane %v1233, 4
  %v1239 = vrot.slane %v1235, 4
  %v1240 = vrot.slane %v1237, 4
  %v1241 = vsel %vm47, %v1238, %v1239
  %v1242 = vsel %vm184, %v1233, %v1241
  %v1243 = vsel %vm47, %v1239, %v1240
  %v1244 = vsel %vm184, %v1235, %v1243
  %v1245 = vsel %vm184, %v1237, %v1240
  %1249 = vst [vmem:[#allocation2 + $0x78] sm:$0xff] %v1242
  %1250 = vst [vmem:[#allocation2 + $0x80] sm:$0xff] %v1244
  %1251 = vst [vmem:[#allocation2 + $0x88] sm:$0xf] %v1245
  %v1252 = vld [vmem:[#allocation3] sm:$0xff]
  %v1253 = vld [vmem:[#allocation3 + $0x8] sm:$0xff]
  %v1254 = vld [vmem:[#allocation3 + $0x10] sm:$0xff]
  %1258 = vrot.lane.b32.xlu0 %v1252, 91
  %v1259 = vpop.permute.xlu0 %1258
  %1260 = vrot.lane.b32.xlu0 %v1253, 91
  %v1261 = vpop.permute.xlu0 %1260
  %1262 = vrot.lane.b32.xlu0 %v1254, 91
  %v1263 = vpop.permute.xlu0 %1262
  %v1264 = vrot.slane %v1259, 4
  %v1265 = vrot.slane %v1261, 4
  %v1266 = vrot.slane %v1263, 4
  %v1267 = vsel %vm47, %v1264, %v1265
  %v1268 = vsel %vm211, %v1259, %v1267
  %v1269 = vsel %vm47, %v1265, %v1266
  %v1270 = vsel %vm211, %v1261, %v1269
  %v1271 = vsel %vm211, %v1263, %v1266
  %1275 = vst [vmem:[#allocation2 + $0x8c] sm:$0xff] %v1268
  %1276 = vst [vmem:[#allocation2 + $0x94] sm:$0xff] %v1270
  %1277 = vst [vmem:[#allocation2 + $0x9c] sm:$0xf] %v1271
  %v1278 = vld [vmem:[#allocation3] sm:$0xff]
  %v1279 = vld [vmem:[#allocation3 + $0x8] sm:$0xff]
  %v1280 = vld [vmem:[#allocation3 + $0x10] sm:$0xff]
  %1284 = vrot.lane.b32.xlu0 %v1278, 90
  %v1285 = vpop.permute.xlu0 %1284
  %1286 = vrot.lane.b32.xlu0 %v1279, 90
  %v1287 = vpop.permute.xlu0 %1286
  %1288 = vrot.lane.b32.xlu0 %v1280, 90
  %v1289 = vpop.permute.xlu0 %1288
  %v1290 = vrot.slane %v1285, 4
  %v1291 = vrot.slane %v1287, 4
  %v1292 = vrot.slane %v1289, 4
  %v1293 = vsel %vm47, %v1290, %v1291
  %v1294 = vsel %vm238, %v1285, %v1293
  %v1295 = vsel %vm47, %v1291, %v1292
  %v1296 = vsel %vm238, %v1287, %v1295
  %v1297 = vsel %vm238, %v1289, %v1292
  %1301 = vst [vmem:[#allocation2 + $0xa0] sm:$0xff] %v1294
  %1302 = vst [vmem:[#allocation2 + $0xa8] sm:$0xff] %v1296
  %1303 = vst [vmem:[#allocation2 + $0xb0] sm:$0xf] %v1297
  %v1304 = vld [vmem:[%s4] sm:$0xf]
  %v1305 = vld [vmem:[#allocation2] sm:$0xff]
  %v1306 = vld [vmem:[#allocation2 + $0x8] sm:$0xff]
  %v1307 = vld [vmem:[#allocation2 + $0x10] sm:$0xf]
  %v1308 = vld [vmem:[#allocation2 + $0x14] sm:$0xff]
  %v1309 = vld [vmem:[#allocation2 + $0x1c] sm:$0xff]
  %v1310 = vld [vmem:[#allocation2 + $0x24] sm:$0xf]
  %v1311 = vld [vmem:[#allocation2 + $0x28] sm:$0xff]
  %v1312 = vld [vmem:[#allocation2 + $0x30] sm:$0xff]
  %v1313 = vld [vmem:[#allocation2 + $0x38] sm:$0xf]
  %v1314 = vld [vmem:[#allocation2 + $0x3c] sm:$0xff]
  %v1315 = vld [vmem:[#allocation2 + $0x44] sm:$0xff]
  %v1316 = vld [vmem:[#allocation2 + $0x4c] sm:$0xf]
  %v1317 = vld [vmem:[#allocation2 + $0x50] sm:$0xff]
  %v1318 = vld [vmem:[#allocation2 + $0x58] sm:$0xff]
  %v1319 = vld [vmem:[#allocation2 + $0x60] sm:$0xf]
  %v1320 = vld [vmem:[#allocation2 + $0x64] sm:$0xff]
  %v1321 = vld [vmem:[#allocation2 + $0x6c] sm:$0xff]
  %v1322 = vld [vmem:[#allocation2 + $0x74] sm:$0xf]
  %v1323 = vld [vmem:[#allocation2 + $0x78] sm:$0xff]
  %v1324 = vld [vmem:[#allocation2 + $0x80] sm:$0xff]
  %v1325 = vld [vmem:[#allocation2 + $0x88] sm:$0xf]
  %v1326 = vld [vmem:[#allocation2 + $0x8c] sm:$0xff]
  %v1327 = vld [vmem:[#allocation2 + $0x94] sm:$0xff]
  %v1328 = vld [vmem:[#allocation2 + $0x9c] sm:$0xf]
  %v1329 = vld [vmem:[#allocation2 + $0xa0] sm:$0xff]
  %v1330 = vld [vmem:[#allocation2 + $0xa8] sm:$0xff]
  %v1331 = vld [vmem:[#allocation2 + $0xb0] sm:$0xf]
  %v1359 = vunpack.c.l.b16 %v1305
  %v1360 = vunpack.c.h.b16 %v1305
  %v1361 = vunpack.c.l.b16 %v1306
  %v1362 = vunpack.c.h.b16 %v1306
  %v1363 = vunpack.c.l.b16 %v1307
  %v1364 = vunpack.c.l.b16 %v1308
  %v1365 = vunpack.c.h.b16 %v1308
  %v1366 = vunpack.c.l.b16 %v1309
  %v1367 = vunpack.c.h.b16 %v1309
  %v1368 = vunpack.c.l.b16 %v1310
  %v1369 = vunpack.c.l.b16 %v1311
  %v1370 = vunpack.c.h.b16 %v1311
  %v1371 = vunpack.c.l.b16 %v1312
  %v1372 = vunpack.c.h.b16 %v1312
  %v1373 = vunpack.c.l.b16 %v1313
  %v1374 = vunpack.c.l.b16 %v1314
  %v1375 = vunpack.c.h.b16 %v1314
  %v1376 = vunpack.c.l.b16 %v1315
  %v1377 = vunpack.c.h.b16 %v1315
  %v1378 = vunpack.c.l.b16 %v1316
  %v1379 = vunpack.c.l.b16 %v1317
  %v1380 = vunpack.c.h.b16 %v1317
  %v1381 = vunpack.c.l.b16 %v1318
  %v1382 = vunpack.c.h.b16 %v1318
  %v1383 = vunpack.c.l.b16 %v1319
  %v1384 = vunpack.c.l.b16 %v1320
  %v1385 = vunpack.c.h.b16 %v1320
  %v1386 = vunpack.c.l.b16 %v1321
  %v1387 = vunpack.c.h.b16 %v1321
  %v1388 = vunpack.c.l.b16 %v1322
  %v1389 = vunpack.c.l.b16 %v1323
  %v1390 = vunpack.c.h.b16 %v1323
  %v1391 = vunpack.c.l.b16 %v1324
  %v1392 = vunpack.c.h.b16 %v1324
  %v1393 = vunpack.c.l.b16 %v1325
  %v1394 = vunpack.c.l.b16 %v1326
  %v1395 = vunpack.c.h.b16 %v1326
  %v1396 = vunpack.c.l.b16 %v1327
  %v1397 = vunpack.c.h.b16 %v1327
  %v1398 = vunpack.c.l.b16 %v1328
  %v1399 = vunpack.c.l.b16 %v1329
  %v1400 = vunpack.c.h.b16 %v1329
  %v1401 = vunpack.c.l.b16 %v1330
  %v1402 = vunpack.c.h.b16 %v1330
  %v1403 = vunpack.c.l.b16 %v1331
  %v1404 = vpack.c.b16 %v1364, %v1359
  %v1405 = vpack.c.b16 %v1365, %v1360
  %v1406 = vpack.c.b16 %v1366, %v1361
  %v1407 = vpack.c.b16 %v1367, %v1362
  %v1408 = vpack.c.b16 %v1368, %v1363
  %v1409 = vpack.c.b16 %v1374, %v1369
  %v1410 = vpack.c.b16 %v1375, %v1370
  %v1411 = vpack.c.b16 %v1376, %v1371
  %v1412 = vpack.c.b16 %v1377, %v1372
  %v1413 = vpack.c.b16 %v1378, %v1373
  %v1414 = vpack.c.b16 %v1384, %v1379
  %v1415 = vpack.c.b16 %v1385, %v1380
  %v1416 = vpack.c.b16 %v1386, %v1381
  %v1417 = vpack.c.b16 %v1387, %v1382
  %v1418 = vpack.c.b16 %v1388, %v1383
  %v1419 = vpack.c.b16 %v1394, %v1389
  %v1420 = vpack.c.b16 %v1395, %v1390
  %v1421 = vpack.c.b16 %v1396, %v1391
  %v1422 = vpack.c.b16 %v1397, %v1392
  %v1423 = vpack.c.b16 %v1398, %v1393
  %v1424 = vpack.c.b16 %v1399, %v1399
  %v1425 = vpack.c.b16 %v1400, %v1400
  %v1426 = vpack.c.b16 %v1401, %v1401
  %v1427 = vpack.c.b16 %v1402, %v1402
  %v1428 = vpack.c.b16 %v1403, %v1403
  %v1450 = vsel %vm394, %v1304, 0
  %v1453 = vsel %vm398, %v1424, 0
  %v1456 = vsel %vm398, %v1425, 0
  %v1459 = vsel %vm398, %v1426, 0
  %v1462 = vsel %vm398, %v1427, 0
  %v1465 = vsel %vm398, %v1428, 0
  %1467 = vmatprep.subr.bf16.mxu0 0
  %1468 = vmatpush1.bf16.msra.mxu0 0
  %1469 = vmatprep.subr.bf16.mxu0 0
  %1470 = vmatpush1.bf16.msra.mxu0 0
  %1471 = vmatprep.subr.bf16.mxu0 0
  %1472 = vmatpush1.bf16.msra.mxu0 0
  %1473 = vmatprep.subr.bf16.mxu0 %v1456
  %1474 = vmatpush1.bf16.msra.mxu0 %v1453
  %1475 = vmatprep.subr.bf16.mxu0 %v1420
  %1476 = vmatpush1.bf16.msra.mxu0 %v1419
  %1477 = vmatprep.subr.bf16.mxu0 %v1415
  %1478 = vmatpush1.bf16.msra.mxu0 %v1414
  %1479 = vmatprep.subr.bf16.mxu0 %v1410
  %1480 = vmatpush1.bf16.msra.mxu0 %v1409
  %1481 = vmatprep.subr.bf16.mxu0 %v1405
  %1482 = vmatpush1.bf16.msra.mxu0 %v1404
  %1483 = vmatprep.subr.bf16.mxu0 0
  %1484 = vmatpush2.bf16.msra.mxu0 0
  %1485 = vmatprep.subr.bf16.mxu0 0
  %1486 = vmatpush2.bf16.msra.mxu0 0
  %1487 = vmatprep.subr.bf16.mxu0 0
  %1488 = vmatpush2.bf16.msra.mxu0 0
  %1489 = vmatprep.subr.bf16.mxu0 0
  %1490 = vmatpush2.bf16.msra.mxu0 0
  %1491 = vmatprep.subr.bf16.mxu0 0
  %1492 = vmatpush2.bf16.msra.mxu0 0
  %1493 = vmatprep.subr.bf16.mxu0 0
  %1494 = vmatpush2.bf16.msra.mxu0 0
  %1495 = vmatprep.subr.bf16.mxu0 0
  %1496 = vmatpush2.bf16.msra.mxu0 0
  %1497 = vmatprep.subr.bf16.mxu0 0
  %1498 = vmatpush2.bf16.msra.mxu0 0
  %1499 = vmatprep.mubr.bf16.mxu0 0
  %1500 = vmatmul.mubr.bf16.gmra.mxu0 %v1450
  %v1501 = vpop.f32.mrf.mxu0
  %v1502 = vadd.f32 0.0, %v1501
  %v1503 = vpop.f32.mrf.mxu0
  %v1504 = vadd.f32 0.0, %v1503
  %v1505 = vpop.f32.mrf.mxu0
  %v1506 = vpop.f32.mrf.mxu0
  %1507 = vdwg.mxu0
  %1508 = vmatprep.subr.bf16.mxu0 0
  %1509 = vmatpush1.bf16.msra.mxu0 0
  %1510 = vmatprep.subr.bf16.mxu0 0
  %1511 = vmatpush1.bf16.msra.mxu0 0
  %1512 = vmatprep.subr.bf16.mxu0 0
  %1513 = vmatpush1.bf16.msra.mxu0 0
  %1514 = vmatprep.subr.bf16.mxu0 %v1462
  %1515 = vmatpush1.bf16.msra.mxu0 %v1459
  %1516 = vmatprep.subr.bf16.mxu0 %v1422
  %1517 = vmatpush1.bf16.msra.mxu0 %v1421
  %1518 = vmatprep.subr.bf16.mxu0 %v1417
  %1519 = vmatpush1.bf16.msra.mxu0 %v1416
  %1520 = vmatprep.subr.bf16.mxu0 %v1412
  %1521 = vmatpush1.bf16.msra.mxu0 %v1411
  %1522 = vmatprep.subr.bf16.mxu0 %v1407
  %1523 = vmatpush1.bf16.msra.mxu0 %v1406
  %1524 = vmatprep.subr.bf16.mxu0 0
  %1525 = vmatpush2.bf16.msra.mxu0 0
  %1526 = vmatprep.subr.bf16.mxu0 0
  %1527 = vmatpush2.bf16.msra.mxu0 0
  %1528 = vmatprep.subr.bf16.mxu0 0
  %1529 = vmatpush2.bf16.msra.mxu0 0
  %1530 = vmatprep.subr.bf16.mxu0 0
  %1531 = vmatpush2.bf16.msra.mxu0 0
  %1532 = vmatprep.subr.bf16.mxu0 0
  %1533 = vmatpush2.bf16.msra.mxu0 0
  %1534 = vmatprep.subr.bf16.mxu0 0
  %1535 = vmatpush2.bf16.msra.mxu0 0
  %1536 = vmatprep.subr.bf16.mxu0 0
  %1537 = vmatpush2.bf16.msra.mxu0 0
  %1538 = vmatprep.subr.bf16.mxu0 0
  %1539 = vmatpush2.bf16.msra.mxu0 0
  %1540 = vmatprep.mubr.bf16.mxu0 0
  %1541 = vmatmul.mubr.bf16.gmra.mxu0 %v1450
  %v1542 = vpop.f32.mrf.mxu0
  %v1543 = vadd.f32 0.0, %v1542
  %v1544 = vpop.f32.mrf.mxu0
  %v1545 = vadd.f32 0.0, %v1544
  %v1546 = vpop.f32.mrf.mxu0
  %v1547 = vpop.f32.mrf.mxu0
  %1548 = vdwg.mxu0
  %1549 = vmatprep.subr.bf16.mxu0 0
  %1550 = vmatpush1.bf16.msra.mxu0 0
  %1551 = vmatprep.subr.bf16.mxu0 0
  %1552 = vmatpush1.bf16.msra.mxu0 0
  %1553 = vmatprep.subr.bf16.mxu0 0
  %1554 = vmatpush1.bf16.msra.mxu0 0
  %1555 = vmatprep.subr.bf16.mxu0 0
  %1556 = vmatpush1.bf16.msra.mxu0 %v1465
  %1557 = vmatprep.subr.bf16.mxu0 0
  %1558 = vmatpush1.bf16.msra.mxu0 %v1423
  %1559 = vmatprep.subr.bf16.mxu0 0
  %1560 = vmatpush1.bf16.msra.mxu0 %v1418
  %1561 = vmatprep.subr.bf16.mxu0 0
  %1562 = vmatpush1.bf16.msra.mxu0 %v1413
  %1563 = vmatprep.subr.bf16.mxu0 0
  %1564 = vmatpush1.bf16.msra.mxu0 %v1408
  %1565 = vmatprep.subr.bf16.mxu0 0
  %1566 = vmatpush2.bf16.msra.mxu0 0
  %1567 = vmatprep.subr.bf16.mxu0 0
  %1568 = vmatpush2.bf16.msra.mxu0 0
  %1569 = vmatprep.subr.bf16.mxu0 0
  %1570 = vmatpush2.bf16.msra.mxu0 0
  %1571 = vmatprep.subr.bf16.mxu0 0
  %1572 = vmatpush2.bf16.msra.mxu0 0
  %1573 = vmatprep.subr.bf16.mxu0 0
  %1574 = vmatpush2.bf16.msra.mxu0 0
  %1575 = vmatprep.subr.bf16.mxu0 0
  %1576 = vmatpush2.bf16.msra.mxu0 0
  %1577 = vmatprep.subr.bf16.mxu0 0
  %1578 = vmatpush2.bf16.msra.mxu0 0
  %1579 = vmatprep.subr.bf16.mxu0 0
  %1580 = vmatpush2.bf16.msra.mxu0 0
  %1581 = vmatprep.mubr.bf16.mxu0 0
  %1582 = vmatmul.mubr.bf16.gmra.mxu0 %v1450
  %v1583 = vpop.f32.mrf.mxu0
  %v1584 = vadd.f32 0.0, %v1583
  %v1585 = vpop.f32.mrf.mxu0
  %v1586 = vpop.f32.mrf.mxu0
  %v1587 = vpop.f32.mrf.mxu0
  %1588 = vdwg.mxu0
  %v1589 = vmul.f32 %v1502, %v540
  %v1590 = vmul.f32 %v1504, %v544
  %v1591 = vmul.f32 %v1543, %v548
  %v1592 = vmul.f32 %v1545, %v552
  %v1593 = vmul.f32 %v1584, %v556
  %1594 = vmatprep.subr.mxu0 0.0
  %1595 = vmatpush1.msra.mxu0 1.0
  %1596 = vmatprep.subr.mxu0 0.0
  %1597 = vmatpush1.msra.mxu0 1.0
  %1598 = vmatprep.subr.mxu0 0.0
  %1599 = vmatpush1.msra.mxu0 1.0
  %1600 = vmatprep.subr.mxu0 0.0
  %1601 = vmatpush1.msra.mxu0 1.0
  %1602 = vmatprep.subr.mxu0 0.0
  %1603 = vmatpush1.msra.mxu0 1.0
  %1604 = vmatprep.subr.mxu0 0.0
  %1605 = vmatpush1.msra.mxu0 1.0
  %1606 = vmatprep.subr.mxu0 0.0
  %1607 = vmatpush1.msra.mxu0 1.0
  %1608 = vmatprep.subr.mxu0 0.0
  %1609 = vmatpush1.msra.mxu0 1.0
  %1610 = vmatprep.subr.mxu0 0.0
  %1611 = vmatpush1.msra.mxu0 1.0
  %1612 = vmatprep.subr.mxu0 0.0
  %1613 = vmatpush1.msra.mxu0 1.0
  %1614 = vmatprep.subr.mxu0 0.0
  %1615 = vmatpush1.msra.mxu0 1.0
  %1616 = vmatprep.subr.mxu0 0.0
  %1617 = vmatpush1.msra.mxu0 1.0
  %1618 = vmatprep.subr.mxu0 0.0
  %1619 = vmatpush1.msra.mxu0 1.0
  %1620 = vmatprep.subr.mxu0 0.0
  %1621 = vmatpush1.msra.mxu0 1.0
  %1622 = vmatprep.subr.mxu0 0.0
  %1623 = vmatpush1.msra.mxu0 1.0
  %1624 = vmatprep.subr.mxu0 0.0
  %1625 = vmatpush1.msra.mxu0 1.0
  %1626 = vmatprep.subr.mxu0 0.0
  %1627 = vmatpush2.msra.mxu0 1.0
  %1628 = vmatprep.subr.mxu0 0.0
  %1629 = vmatpush2.msra.mxu0 1.0
  %1630 = vmatprep.subr.mxu0 0.0
  %1631 = vmatpush2.msra.mxu0 1.0
  %1632 = vmatprep.subr.mxu0 0.0
  %1633 = vmatpush2.msra.mxu0 1.0
  %1634 = vmatprep.subr.mxu0 0.0
  %1635 = vmatpush2.msra.mxu0 1.0
  %1636 = vmatprep.subr.mxu0 0.0
  %1637 = vmatpush2.msra.mxu0 1.0
  %1638 = vmatprep.subr.mxu0 0.0
  %1639 = vmatpush2.msra.mxu0 1.0
  %1640 = vmatprep.subr.mxu0 0.0
  %1641 = vmatpush2.msra.mxu0 1.0
  %1642 = vmatprep.subr.mxu0 0.0
  %1643 = vmatpush2.msra.mxu0 1.0
  %1644 = vmatprep.subr.mxu0 0.0
  %1645 = vmatpush2.msra.mxu0 1.0
  %1646 = vmatprep.subr.mxu0 0.0
  %1647 = vmatpush2.msra.mxu0 1.0
  %1648 = vmatprep.subr.mxu0 0.0
  %1649 = vmatpush2.msra.mxu0 1.0
  %1650 = vmatprep.subr.mxu0 0.0
  %1651 = vmatpush2.msra.mxu0 1.0
  %1652 = vmatprep.subr.mxu0 0.0
  %1653 = vmatpush2.msra.mxu0 1.0
  %1654 = vmatprep.subr.mxu0 0.0
  %1655 = vmatpush2.msra.mxu0 1.0
  %1656 = vmatprep.subr.mxu0 0.0
  %1657 = vmatpush2.msra.mxu0 1.0
  %1658 = vmatprep.mubr.f32.mxu0 %v1590
  %1659 = vmatmul.mubr.f32.gmra.mxu0 %v1589
  %v1660 = vpop.f32.mrf.mxu0
  %v1661 = vadd.f32 0.0, %v1660
  %v1662 = vpop.f32.mrf.mxu0
  %1663 = vdwg.mxu0
  %1664 = vmatprep.subr.mxu0 0.0
  %1665 = vmatpush1.msra.mxu0 1.0
  %1666 = vmatprep.subr.mxu0 0.0
  %1667 = vmatpush1.msra.mxu0 1.0
  %1668 = vmatprep.subr.mxu0 0.0
  %1669 = vmatpush1.msra.mxu0 1.0
  %1670 = vmatprep.subr.mxu0 0.0
  %1671 = vmatpush1.msra.mxu0 1.0
  %1672 = vmatprep.subr.mxu0 0.0
  %1673 = vmatpush1.msra.mxu0 1.0
  %1674 = vmatprep.subr.mxu0 0.0
  %1675 = vmatpush1.msra.mxu0 1.0
  %1676 = vmatprep.subr.mxu0 0.0
  %1677 = vmatpush1.msra.mxu0 1.0
  %1678 = vmatprep.subr.mxu0 0.0
  %1679 = vmatpush1.msra.mxu0 1.0
  %1680 = vmatprep.subr.mxu0 0.0
  %1681 = vmatpush1.msra.mxu0 1.0
  %1682 = vmatprep.subr.mxu0 0.0
  %1683 = vmatpush1.msra.mxu0 1.0
  %1684 = vmatprep.subr.mxu0 0.0
  %1685 = vmatpush1.msra.mxu0 1.0
  %1686 = vmatprep.subr.mxu0 0.0
  %1687 = vmatpush1.msra.mxu0 1.0
  %1688 = vmatprep.subr.mxu0 0.0
  %1689 = vmatpush1.msra.mxu0 1.0
  %1690 = vmatprep.subr.mxu0 0.0
  %1691 = vmatpush1.msra.mxu0 1.0
  %1692 = vmatprep.subr.mxu0 0.0
  %1693 = vmatpush1.msra.mxu0 1.0
  %1694 = vmatprep.subr.mxu0 0.0
  %1695 = vmatpush1.msra.mxu0 1.0
  %1696 = vmatprep.subr.mxu0 0.0
  %1697 = vmatpush2.msra.mxu0 1.0
  %1698 = vmatprep.subr.mxu0 0.0
  %1699 = vmatpush2.msra.mxu0 1.0
  %1700 = vmatprep.subr.mxu0 0.0
  %1701 = vmatpush2.msra.mxu0 1.0
  %1702 = vmatprep.subr.mxu0 0.0
  %1703 = vmatpush2.msra.mxu0 1.0
  %1704 = vmatprep.subr.mxu0 0.0
  %1705 = vmatpush2.msra.mxu0 1.0
  %1706 = vmatprep.subr.mxu0 0.0
  %1707 = vmatpush2.msra.mxu0 1.0
  %1708 = vmatprep.subr.mxu0 0.0
  %1709 = vmatpush2.msra.mxu0 1.0
  %1710 = vmatprep.subr.mxu0 0.0
  %1711 = vmatpush2.msra.mxu0 1.0
  %1712 = vmatprep.subr.mxu0 0.0
  %1713 = vmatpush2.msra.mxu0 1.0
  %1714 = vmatprep.subr.mxu0 0.0
  %1715 = vmatpush2.msra.mxu0 1.0
  %1716 = vmatprep.subr.mxu0 0.0
  %1717 = vmatpush2.msra.mxu0 1.0
  %1718 = vmatprep.subr.mxu0 0.0
  %1719 = vmatpush2.msra.mxu0 1.0
  %1720 = vmatprep.subr.mxu0 0.0
  %1721 = vmatpush2.msra.mxu0 1.0
  %1722 = vmatprep.subr.mxu0 0.0
  %1723 = vmatpush2.msra.mxu0 1.0
  %1724 = vmatprep.subr.mxu0 0.0
  %1725 = vmatpush2.msra.mxu0 1.0
  %1726 = vmatprep.subr.mxu0 0.0
  %1727 = vmatpush2.msra.mxu0 1.0
  %1728 = vmatprep.mubr.f32.mxu0 %v1592
  %1729 = vmatmul.mubr.f32.gmra.mxu0 %v1591
  %v1730 = vpop.f32.mrf.mxu0
  %v1731 = vadd.f32 %v1661, %v1730
  %v1732 = vpop.f32.mrf.mxu0
  %1733 = vdwg.mxu0
  %1734 = vmatprep.subr.mxu0 0.0
  %1735 = vmatpush1.msra.mxu0 1.0
  %1736 = vmatprep.subr.mxu0 0.0
  %1737 = vmatpush1.msra.mxu0 1.0
  %1738 = vmatprep.subr.mxu0 0.0
  %1739 = vmatpush1.msra.mxu0 1.0
  %1740 = vmatprep.subr.mxu0 0.0
  %1741 = vmatpush1.msra.mxu0 1.0
  %1742 = vmatprep.subr.mxu0 0.0
  %1743 = vmatpush1.msra.mxu0 1.0
  %1744 = vmatprep.subr.mxu0 0.0
  %1745 = vmatpush1.msra.mxu0 1.0
  %1746 = vmatprep.subr.mxu0 0.0
  %1747 = vmatpush1.msra.mxu0 1.0
  %1748 = vmatprep.subr.mxu0 0.0
  %1749 = vmatpush1.msra.mxu0 1.0
  %1750 = vmatprep.subr.mxu0 0.0
  %1751 = vmatpush1.msra.mxu0 1.0
  %1752 = vmatprep.subr.mxu0 0.0
  %1753 = vmatpush1.msra.mxu0 1.0
  %1754 = vmatprep.subr.mxu0 0.0
  %1755 = vmatpush1.msra.mxu0 1.0
  %1756 = vmatprep.subr.mxu0 0.0
  %1757 = vmatpush1.msra.mxu0 1.0
  %1758 = vmatprep.subr.mxu0 0.0
  %1759 = vmatpush1.msra.mxu0 1.0
  %1760 = vmatprep.subr.mxu0 0.0
  %1761 = vmatpush1.msra.mxu0 1.0
  %1762 = vmatprep.subr.mxu0 0.0
  %1763 = vmatpush1.msra.mxu0 1.0
  %1764 = vmatprep.subr.mxu0 0.0
  %1765 = vmatpush1.msra.mxu0 1.0
  %1766 = vmatprep.subr.mxu0 0.0
  %1767 = vmatpush2.msra.mxu0 0.0
  %1768 = vmatprep.subr.mxu0 0.0
  %1769 = vmatpush2.msra.mxu0 0.0
  %1770 = vmatprep.subr.mxu0 0.0
  %1771 = vmatpush2.msra.mxu0 0.0
  %1772 = vmatprep.subr.mxu0 0.0
  %1773 = vmatpush2.msra.mxu0 0.0
  %1774 = vmatprep.subr.mxu0 0.0
  %1775 = vmatpush2.msra.mxu0 0.0
  %1776 = vmatprep.subr.mxu0 0.0
  %1777 = vmatpush2.msra.mxu0 0.0
  %1778 = vmatprep.subr.mxu0 0.0
  %1779 = vmatpush2.msra.mxu0 0.0
  %1780 = vmatprep.subr.mxu0 0.0
  %1781 = vmatpush2.msra.mxu0 0.0
  %1782 = vmatprep.subr.mxu0 0.0
  %1783 = vmatpush2.msra.mxu0 0.0
  %1784 = vmatprep.subr.mxu0 0.0
  %1785 = vmatpush2.msra.mxu0 0.0
  %1786 = vmatprep.subr.mxu0 0.0
  %1787 = vmatpush2.msra.mxu0 0.0
  %1788 = vmatprep.subr.mxu0 0.0
  %1789 = vmatpush2.msra.mxu0 0.0
  %1790 = vmatprep.subr.mxu0 0.0
  %1791 = vmatpush2.msra.mxu0 0.0
  %1792 = vmatprep.subr.mxu0 0.0
  %1793 = vmatpush2.msra.mxu0 0.0
  %1794 = vmatprep.subr.mxu0 0.0
  %1795 = vmatpush2.msra.mxu0 0.0
  %1796 = vmatprep.subr.mxu0 0.0
  %1797 = vmatpush2.msra.mxu0 0.0
  %1798 = vmatprep.mubr.f32.mxu0 0.0
  %1799 = vmatmul.mubr.f32.gmra.mxu0 %v1593
  %v1800 = vpop.f32.mrf.mxu0
  %v1801 = vadd.f32 %v1731, %v1800
  %v1802 = vpop.f32.mrf.mxu0
  %1803 = vdwg.mxu0
  %v1804 = vmul.f32 %v1801, 0.001953125
  %1806 = vset.pattern.permute.xlu0 0
  %1807 = vperm.xlu0 %1806, %v1804
  %v1808 = vpop.permute.xlu0 %1807
  %v1810 = vsub.f32 %v1502, %v1808
  %v1811 = vsub.f32 %v1504, %v1808
  %v1812 = vsub.f32 %v1543, %v1808
  %v1813 = vsub.f32 %v1545, %v1808
  %v1814 = vsub.f32 %v1584, %v1808
  %v1815 = vmul.f32 %v1810, %v540
  %v1816 = vmul.f32 %v1811, %v544
  %v1817 = vmul.f32 %v1812, %v548
  %v1818 = vmul.f32 %v1813, %v552
  %v1819 = vmul.f32 %v1814, %v556
  %v1820 = vmul.f32 %v1815, %v1815
  %v1821 = vmul.f32 %v1816, %v1816
  %v1822 = vmul.f32 %v1817, %v1817
  %v1823 = vmul.f32 %v1818, %v1818
  %v1824 = vmul.f32 %v1819, %v1819
  %1825 = vmatprep.subr.mxu0 0.0
  %1826 = vmatpush1.msra.mxu0 1.0
  %1827 = vmatprep.subr.mxu0 0.0
  %1828 = vmatpush1.msra.mxu0 1.0
  %1829 = vmatprep.subr.mxu0 0.0
  %1830 = vmatpush1.msra.mxu0 1.0
  %1831 = vmatprep.subr.mxu0 0.0
  %1832 = vmatpush1.msra.mxu0 1.0
  %1833 = vmatprep.subr.mxu0 0.0
  %1834 = vmatpush1.msra.mxu0 1.0
  %1835 = vmatprep.subr.mxu0 0.0
  %1836 = vmatpush1.msra.mxu0 1.0
  %1837 = vmatprep.subr.mxu0 0.0
  %1838 = vmatpush1.msra.mxu0 1.0
  %1839 = vmatprep.subr.mxu0 0.0
  %1840 = vmatpush1.msra.mxu0 1.0
  %1841 = vmatprep.subr.mxu0 0.0
  %1842 = vmatpush1.msra.mxu0 1.0
  %1843 = vmatprep.subr.mxu0 0.0
  %1844 = vmatpush1.msra.mxu0 1.0
  %1845 = vmatprep.subr.mxu0 0.0
  %1846 = vmatpush1.msra.mxu0 1.0
  %1847 = vmatprep.subr.mxu0 0.0
  %1848 = vmatpush1.msra.mxu0 1.0
  %1849 = vmatprep.subr.mxu0 0.0
  %1850 = vmatpush1.msra.mxu0 1.0
  %1851 = vmatprep.subr.mxu0 0.0
  %1852 = vmatpush1.msra.mxu0 1.0
  %1853 = vmatprep.subr.mxu0 0.0
  %1854 = vmatpush1.msra.mxu0 1.0
  %1855 = vmatprep.subr.mxu0 0.0
  %1856 = vmatpush1.msra.mxu0 1.0
  %1857 = vmatprep.subr.mxu0 0.0
  %1858 = vmatpush2.msra.mxu0 1.0
  %1859 = vmatprep.subr.mxu0 0.0
  %1860 = vmatpush2.msra.mxu0 1.0
  %1861 = vmatprep.subr.mxu0 0.0
  %1862 = vmatpush2.msra.mxu0 1.0
  %1863 = vmatprep.subr.mxu0 0.0
  %1864 = vmatpush2.msra.mxu0 1.0
  %1865 = vmatprep.subr.mxu0 0.0
  %1866 = vmatpush2.msra.mxu0 1.0
  %1867 = vmatprep.subr.mxu0 0.0
  %1868 = vmatpush2.msra.mxu0 1.0
  %1869 = vmatprep.subr.mxu0 0.0
  %1870 = vmatpush2.msra.mxu0 1.0
  %1871 = vmatprep.subr.mxu0 0.0
  %1872 = vmatpush2.msra.mxu0 1.0
  %1873 = vmatprep.subr.mxu0 0.0
  %1874 = vmatpush2.msra.mxu0 1.0
  %1875 = vmatprep.subr.mxu0 0.0
  %1876 = vmatpush2.msra.mxu0 1.0
  %1877 = vmatprep.subr.mxu0 0.0
  %1878 = vmatpush2.msra.mxu0 1.0
  %1879 = vmatprep.subr.mxu0 0.0
  %1880 = vmatpush2.msra.mxu0 1.0
  %1881 = vmatprep.subr.mxu0 0.0
  %1882 = vmatpush2.msra.mxu0 1.0
  %1883 = vmatprep.subr.mxu0 0.0
  %1884 = vmatpush2.msra.mxu0 1.0
  %1885 = vmatprep.subr.mxu0 0.0
  %1886 = vmatpush2.msra.mxu0 1.0
  %1887 = vmatprep.subr.mxu0 0.0
  %1888 = vmatpush2.msra.mxu0 1.0
  %1889 = vmatprep.mubr.f32.mxu0 %v1821
  %1890 = vmatmul.mubr.f32.gmra.mxu0 %v1820
  %v1891 = vpop.f32.mrf.mxu0
  %v1892 = vadd.f32 0.0, %v1891
  %v1893 = vpop.f32.mrf.mxu0
  %1894 = vdwg.mxu0
  %1895 = vmatprep.subr.mxu0 0.0
  %1896 = vmatpush1.msra.mxu0 1.0
  %1897 = vmatprep.subr.mxu0 0.0
  %1898 = vmatpush1.msra.mxu0 1.0
  %1899 = vmatprep.subr.mxu0 0.0
  %1900 = vmatpush1.msra.mxu0 1.0
  %1901 = vmatprep.subr.mxu0 0.0
  %1902 = vmatpush1.msra.mxu0 1.0
  %1903 = vmatprep.subr.mxu0 0.0
  %1904 = vmatpush1.msra.mxu0 1.0
  %1905 = vmatprep.subr.mxu0 0.0
  %1906 = vmatpush1.msra.mxu0 1.0
  %1907 = vmatprep.subr.mxu0 0.0
  %1908 = vmatpush1.msra.mxu0 1.0
  %1909 = vmatprep.subr.mxu0 0.0
  %1910 = vmatpush1.msra.mxu0 1.0
  %1911 = vmatprep.subr.mxu0 0.0
  %1912 = vmatpush1.msra.mxu0 1.0
  %1913 = vmatprep.subr.mxu0 0.0
  %1914 = vmatpush1.msra.mxu0 1.0
  %1915 = vmatprep.subr.mxu0 0.0
  %1916 = vmatpush1.msra.mxu0 1.0
  %1917 = vmatprep.subr.mxu0 0.0
  %1918 = vmatpush1.msra.mxu0 1.0
  %1919 = vmatprep.subr.mxu0 0.0
  %1920 = vmatpush1.msra.mxu0 1.0
  %1921 = vmatprep.subr.mxu0 0.0
  %1922 = vmatpush1.msra.mxu0 1.0
  %1923 = vmatprep.subr.mxu0 0.0
  %1924 = vmatpush1.msra.mxu0 1.0
  %1925 = vmatprep.subr.mxu0 0.0
  %1926 = vmatpush1.msra.mxu0 1.0
  %1927 = vmatprep.subr.mxu0 0.0
  %1928 = vmatpush2.msra.mxu0 1.0
  %1929 = vmatprep.subr.mxu0 0.0
  %1930 = vmatpush2.msra.mxu0 1.0
  %1931 = vmatprep.subr.mxu0 0.0
  %1932 = vmatpush2.msra.mxu0 1.0
  %1933 = vmatprep.subr.mxu0 0.0
  %1934 = vmatpush2.msra.mxu0 1.0
  %1935 = vmatprep.subr.mxu0 0.0
  %1936 = vmatpush2.msra.mxu0 1.0
  %1937 = vmatprep.subr.mxu0 0.0
  %1938 = vmatpush2.msra.mxu0 1.0
  %1939 = vmatprep.subr.mxu0 0.0
  %1940 = vmatpush2.msra.mxu0 1.0
  %1941 = vmatprep.subr.mxu0 0.0
  %1942 = vmatpush2.msra.mxu0 1.0
  %1943 = vmatprep.subr.mxu0 0.0
  %1944 = vmatpush2.msra.mxu0 1.0
  %1945 = vmatprep.subr.mxu0 0.0
  %1946 = vmatpush2.msra.mxu0 1.0
  %1947 = vmatprep.subr.mxu0 0.0
  %1948 = vmatpush2.msra.mxu0 1.0
  %1949 = vmatprep.subr.mxu0 0.0
  %1950 = vmatpush2.msra.mxu0 1.0
  %1951 = vmatprep.subr.mxu0 0.0
  %1952 = vmatpush2.msra.mxu0 1.0
  %1953 = vmatprep.subr.mxu0 0.0
  %1954 = vmatpush2.msra.mxu0 1.0
  %1955 = vmatprep.subr.mxu0 0.0
  %1956 = vmatpush2.msra.mxu0 1.0
  %1957 = vmatprep.subr.mxu0 0.0
  %1958 = vmatpush2.msra.mxu0 1.0
  %1959 = vmatprep.mubr.f32.mxu0 %v1823
  %1960 = vmatmul.mubr.f32.gmra.mxu0 %v1822
  %v1961 = vpop.f32.mrf.mxu0
  %v1962 = vadd.f32 %v1892, %v1961
  %v1963 = vpop.f32.mrf.mxu0
  %1964 = vdwg.mxu0
  %1965 = vmatprep.subr.mxu0 0.0
  %1966 = vmatpush1.msra.mxu0 1.0
  %1967 = vmatprep.subr.mxu0 0.0
  %1968 = vmatpush1.msra.mxu0 1.0
  %1969 = vmatprep.subr.mxu0 0.0
  %1970 = vmatpush1.msra.mxu0 1.0
  %1971 = vmatprep.subr.mxu0 0.0
  %1972 = vmatpush1.msra.mxu0 1.0
  %1973 = vmatprep.subr.mxu0 0.0
  %1974 = vmatpush1.msra.mxu0 1.0
  %1975 = vmatprep.subr.mxu0 0.0
  %1976 = vmatpush1.msra.mxu0 1.0
  %1977 = vmatprep.subr.mxu0 0.0
  %1978 = vmatpush1.msra.mxu0 1.0
  %1979 = vmatprep.subr.mxu0 0.0
  %1980 = vmatpush1.msra.mxu0 1.0
  %1981 = vmatprep.subr.mxu0 0.0
  %1982 = vmatpush1.msra.mxu0 1.0
  %1983 = vmatprep.subr.mxu0 0.0
  %1984 = vmatpush1.msra.mxu0 1.0
  %1985 = vmatprep.subr.mxu0 0.0
  %1986 = vmatpush1.msra.mxu0 1.0
  %1987 = vmatprep.subr.mxu0 0.0
  %1988 = vmatpush1.msra.mxu0 1.0
  %1989 = vmatprep.subr.mxu0 0.0
  %1990 = vmatpush1.msra.mxu0 1.0
  %1991 = vmatprep.subr.mxu0 0.0
  %1992 = vmatpush1.msra.mxu0 1.0
  %1993 = vmatprep.subr.mxu0 0.0
  %1994 = vmatpush1.msra.mxu0 1.0
  %1995 = vmatprep.subr.mxu0 0.0
  %1996 = vmatpush1.msra.mxu0 1.0
  %1997 = vmatprep.subr.mxu0 0.0
  %1998 = vmatpush2.msra.mxu0 0.0
  %1999 = vmatprep.subr.mxu0 0.0
  %2000 = vmatpush2.msra.mxu0 0.0
  %2001 = vmatprep.subr.mxu0 0.0
  %2002 = vmatpush2.msra.mxu0 0.0
  %2003 = vmatprep.subr.mxu0 0.0
  %2004 = vmatpush2.msra.mxu0 0.0
  %2005 = vmatprep.subr.mxu0 0.0
  %2006 = vmatpush2.msra.mxu0 0.0
  %2007 = vmatprep.subr.mxu0 0.0
  %2008 = vmatpush2.msra.mxu0 0.0
  %2009 = vmatprep.subr.mxu0 0.0
  %2010 = vmatpush2.msra.mxu0 0.0
  %2011 = vmatprep.subr.mxu0 0.0
  %2012 = vmatpush2.msra.mxu0 0.0
  %2013 = vmatprep.subr.mxu0 0.0
  %2014 = vmatpush2.msra.mxu0 0.0
  %2015 = vmatprep.subr.mxu0 0.0
  %2016 = vmatpush2.msra.mxu0 0.0
  %2017 = vmatprep.subr.mxu0 0.0
  %2018 = vmatpush2.msra.mxu0 0.0
  %2019 = vmatprep.subr.mxu0 0.0
  %2020 = vmatpush2.msra.mxu0 0.0
  %2021 = vmatprep.subr.mxu0 0.0
  %2022 = vmatpush2.msra.mxu0 0.0
  %2023 = vmatprep.subr.mxu0 0.0
  %2024 = vmatpush2.msra.mxu0 0.0
  %2025 = vmatprep.subr.mxu0 0.0
  %2026 = vmatpush2.msra.mxu0 0.0
  %2027 = vmatprep.subr.mxu0 0.0
  %2028 = vmatpush2.msra.mxu0 0.0
  %2029 = vmatprep.mubr.f32.mxu0 0.0
  %2030 = vmatmul.mubr.f32.gmra.mxu0 %v1824
  %v2031 = vpop.f32.mrf.mxu0
  %v2032 = vadd.f32 %v1962, %v2031
  %v2033 = vpop.f32.mrf.mxu0
  %2034 = vdwg.mxu0
  %v2035 = vmul.f32 %v2032, 0.001953125
  %v2036 = vadd.f32 %v2035, 1e-05
  %v2037 = vrsqrt.pop %v2036
  %2038 = vrot.lane.b32.xlu0 %v25, 126
  %v2039 = vpop.permute.xlu0 %2038
  %v2041 = vmul.f32 %v2037, %v2039
  %2043 = vset.pattern.permute.xlu0 0
  %2044 = vperm.xlu0 %2043, %v2041
  %v2045 = vpop.permute.xlu0 %2044
  %v2047 = vmul.f32 %v1810, %v2045
  %v2048 = vmul.f32 %v1811, %v2045
  %v2049 = vmul.f32 %v1812, %v2045
  %v2050 = vmul.f32 %v1813, %v2045
  %v2051 = vmul.f32 %v1814, %v2045
  %2052 = vset.pattern.permute.xlu0 3
  %2053 = vperm.xlu0 %2052, %v25
  %v2054 = vpop.permute.xlu0 %2053
  %v2056 = vadd.f32 %v2047, %v2054
  %v2057 = vadd.f32 %v2048, %v2054
  %v2058 = vadd.f32 %v2049, %v2054
  %v2059 = vadd.f32 %v2050, %v2054
  %v2060 = vadd.f32 %v2051, %v2054
  %v2061 = vld [vmem:[%s1] sm:$0xff]
  %v2062 = vld [vmem:[%s1 + $0x8] sm:$0xff]
  %v2063 = vld [vmem:[%s1 + $0x10] sm:$0xff]
  %v2064 = vld [vmem:[%s1 + $0x18] sm:$0xff]
  %v2065 = vld [vmem:[%s1 + $0x20] sm:$0xff]
  %v2066 = vadd.f32 %v2056, %v2061
  %v2067 = vadd.f32 %v2057, %v2062
  %v2068 = vadd.f32 %v2058, %v2063
  %v2069 = vadd.f32 %v2059, %v2064
  %v2070 = vadd.f32 %v2060, %v2065
  %v2071 = vmax.f32 %v2066, 0.0
  %v2072 = vmax.f32 %v2067, 0.0
  %v2073 = vmax.f32 %v2068, 0.0
  %v2074 = vmax.f32 %v2069, 0.0
  %v2075 = vmax.f32 %v2070, 0.0
  %2076 = vst [vmem:[%s6] sm:$0xff] %v2071
  %2077 = vst [vmem:[%s6 + $0x8] sm:$0xff] %v2072
  %2078 = vst [vmem:[%s6 + $0x10] sm:$0xff] %v2073
  %2079 = vst [vmem:[%s6 + $0x18] sm:$0xff] %v2074
  %2080 = vst [vmem:[%s6 + $0x20] sm:$0xff] %v2075
  // Predicated region
  $region26: #{basic_block_forward.1} parent=0 // pred_check
    _
  $region27: #{basic_block_forward.1} parent=0 // pred_check_branch
    %2082 = sbr.rel (0) target = $region29
  $region28: #{basic_block_forward.1} parent=0 // pred_region
    _
  $region29: #{basic_block_forward.1} parent=0 // pred_fallthru
    _
  // Predicated region
  $region30: #{basic_block_forward.1} parent=0 // pred_check
    _
  $region31: #{basic_block_forward.1} parent=0 // pred_check_branch
    %2084 = sbr.rel (0) target = $region33
  $region32: #{basic_block_forward.1} parent=0 // pred_region
    _
  $region33: #{basic_block_forward.1} parent=0 // pred_fallthru
    _

</llo_original>
